<compile_context>
chip_gen: v7x
topology: tpu7x:2x2x1
jax: 0.10.0
libtpu: 0.0.40
codegen_flags: <defaults>
</compile_context>

<pallas_src>
import functools

import jax
import jax.numpy as jnp
from jax import lax
from jax.experimental import pallas as pl
from jax.experimental.pallas import tpu as pltpu


def hybrid_kernel(x_ref, p_ref, out_ref, *, k, dt, g, l, obs, hid):
    """All activations are (features, batch_tile): batch maps to the 128 lanes."""

    # ---- unpack the packed parameter slab once per grid step (hoisted) ----
    def param(slot, rows, cols):
        return p_ref[slot][:rows, :cols]          # static sub-rectangle of a (S,S) tile

    ew1 = param(0, hid, obs)     # (hid, obs)   encoder layer 1 (transposed)
    eb1 = param(1, hid, 1)       # (hid, 1)
    ew2 = param(2, 3, hid)       # (3, hid)     encoder layer 2
    eb2 = param(3, 3, 1)
    cw1 = param(4, hid, 3)       # (hid, 3)     correction layer 1
    cb1 = param(5, hid, 1)
    cw2 = param(6, 3, hid)       # (3, hid)     correction layer 2
    cb2 = param(7, 3, 1)
    dw1 = param(8, hid, 3)       # (hid, 3)     decoder layer 1
    db1 = param(9, hid, 1)
    dw2 = param(10, obs, hid)    # (obs, hid)   decoder layer 2
    db2 = param(11, obs, 1)

    xT = x_ref[...].astype(jnp.float32)           # (obs, TB), lane-dense
    gl = dt * (g / l)

    # k is a small static Python int (k=2 here); full unroll keeps LLO visibility.
    # TODO(synk): switch to lax.fori_loop(..., unroll=True) if k grows beyond ~4.
    for _ in range(k):                            # HybridEnd2End outer loop
        # ---- PointEncoder: Linear(obs,hid) -> ReLU -> Linear(hid,3) ----
        h = jnp.maximum(jnp.dot(ew1, xT, preferred_element_type=jnp.float32) + eb1, 0.0)
        z = jnp.dot(ew2, h, preferred_element_type=jnp.float32) + eb2     # (3, TB)

        for _ in range(k):                        # HybridDynamics inner loop (same k)
            z0, z1, z2 = z[0:1, :], z[1:2, :], z[2:3, :]   # (1, TB) lane-dense rows
            # theta = atan2(z1, z0): recover cos/sin directly (atan2-free, exact
            # incl. atan2(0,0)=0). Single EUP rsqrt; eps guard avoids subnormal blowup.
            r2 = z0 * z0 + z1 * z1
            safe = r2 > 1e-30
            inv_r = lax.rsqrt(jnp.where(safe, r2, 1.0))
            cos_t = jnp.where(safe, z0 * inv_r, 1.0)       # atan2(0,0)=0 -> cos=1
            sin_t = jnp.where(safe, z1 * inv_r, 0.0)       #                 sin=0

            # SymplecticPendulumSolver (symplectic Euler)
            td = z2 - gl * sin_t                  # theta_dot'
            d = dt * td                           # theta' = theta + d
            cd = jnp.cos(d)
            sd = jnp.sin(d)
            nx = cos_t * cd - sin_t * sd          # cos(theta')
            ny = sin_t * cd + cos_t * sd          # sin(theta')

            zn = jnp.concatenate([nx, ny, td], axis=0)     # (3, TB): cheap sublane merge
            # correction MLP: Linear(3,hid) -> ReLU -> Linear(hid,3), residual add
            hc = jnp.maximum(
                jnp.dot(cw1, zn, preferred_element_type=jnp.float32) + cb1, 0.0)
            z = zn + jnp.dot(cw2, hc, preferred_element_type=jnp.float32) + cb2

        # ---- PointDecoder: Linear(3,hid) -> ReLU -> Linear(hid,obs) ----
        hd = jnp.maximum(jnp.dot(dw1, z, preferred_element_type=jnp.float32) + db1, 0.0)
        xT = jnp.dot(dw2, hd, preferred_element_type=jnp.float32) + db2   # (obs, TB)

    out_ref[...] = xT.astype(out_ref.dtype)       # lane-dense store (last dim = TB)


def _round_up(v, m):
    return -(-v // m) * m


def _pack_params(params, obs, hid):
    """Transpose every Linear to (out,in) / (out,1) and zero-pad into one slab."""
    s = _round_up(max(hid, obs, 8), 8)
    padded = []
    for p in params:
        m = p.T.astype(jnp.float32)               # (out,in) weights, (out,1) biases
        buf = jnp.zeros((s, s), jnp.float32)
        padded.append(buf.at[: m.shape[0], : m.shape[1]].set(m))
    return jnp.stack(padded, axis=0)              # (12, s, s)


def _pick_tb(B):
    # Lane-dense tiles (multiples of 128); aim for >=2 grid steps so the
    # "parallel" batch axis shards across both TensorCores on v7x; cap the
    # tile so the live (hid, tb) f32 intermediates stay far below VMEM.
    if B <= 128 or B % 128 != 0:
        return B                                  # single full block
    tb = min(2048, max(128, (B // 2 // 128) * 128))
    while B % tb != 0:
        tb -= 128
    return tb


def hybrid_end2end(x, params, *, k, dt, g=1.0, l=1.0, tb=None):
    """x: (B, observable_dim) float32; params: flat tuple of 12 (in,out)/(1,out) arrays."""
    B, obs = x.shape
    hid = params[0].shape[1]
    if tb is None:
        tb = _pick_tb(B)
    assert B % tb == 0, "batch must be divisible by the batch tile"

    p_slab = _pack_params(params, obs, hid)       # (12, S, S), a few tens of KiB
    x_t = x.T                                     # (obs, B): batch -> lanes (layout plumbing)

    kernel = functools.partial(hybrid_kernel, k=k, dt=float(dt), g=float(g),
                               l=float(l), obs=obs, hid=hid)

    out_t = pl.pallas_call(
        kernel,
        out_shape=jax.ShapeDtypeStruct((obs, B), jnp.float32),
        grid=(B // tb,),
        in_specs=[
            pl.BlockSpec((obs, tb), lambda i: (0, i)),            # pipelined batch tiles
            pl.BlockSpec(p_slab.shape, lambda i: (0, 0, 0)),      # resident weight slab
        ],
        out_specs=pl.BlockSpec((obs, tb), lambda i: (0, i)),
        compiler_params=pltpu.CompilerParams(
            # batch axis is embarrassingly parallel: shards across both
            # TensorCores on v7x, harmless on single-TC v5e/v6e.
            dimension_semantics=("parallel",),
            vmem_limit_bytes=32 * 1024 * 1024,    # explicit; safe on v5e..v7x
        ),
    )(x_t, p_slab)
    return out_t.T


# ------------------------- pure-JAX reference (for validation) ------------------------
def _ref_forward(x, p, *, k, dt, g=1.0, l=1.0):
    (ew1, eb1, ew2, eb2, cw1, cb1, cw2, cb2, dw1, db1, dw2, db2) = p
    for _ in range(k):
        z = jnp.maximum(x @ ew1 + eb1, 0.0) @ ew2 + eb2
        for _ in range(k):
            cx, cy, td = z[:, 0], z[:, 1], z[:, 2]
            theta = jnp.arctan2(cy, cx)
            td = td - dt * (g / l) * jnp.sin(theta)
            theta = theta + dt * td
            z = jnp.stack([jnp.cos(theta), jnp.sin(theta), td], axis=1)
            z = z + (jnp.maximum(z @ cw1 + cb1, 0.0) @ cw2 + cb2)
        x = jnp.maximum(z @ dw1 + db1, 0.0) @ dw2 + db2
    return x


def _init_params(key, observable_dim, hidden_dim):
    def lin(key, fan_in, fan_out):
        kw, kb = jax.random.split(key)
        bound = 1.0 / jnp.sqrt(float(fan_in))
        w = jax.random.uniform(kw, (fan_in, fan_out), jnp.float32, -bound, bound)
        b = jax.random.uniform(kb, (1, fan_out), jnp.float32, -bound, bound)
        return w, b

    keys = jax.random.split(key, 6)
    ew1, eb1 = lin(keys[0], observable_dim, hidden_dim)   # encoder layer 1
    ew2, eb2 = lin(keys[1], hidden_dim, 3)                # encoder layer 2
    cw1, cb1 = lin(keys[2], 3, hidden_dim)                # correction layer 1
    cw2, cb2 = lin(keys[3], hidden_dim, 3)                # correction layer 2
    dw1, db1 = lin(keys[4], 3, hidden_dim)                # decoder layer 1
    dw2, db2 = lin(keys[5], hidden_dim, observable_dim)   # decoder layer 2
    return (ew1, eb1, ew2, eb2, cw1, cb1, cw2, cb2, dw1, db1, dw2, db2)


if __name__ == "__main__":
    B, OBS, HID = 8, 12, 30
    DT, G, L, K = 0.1, 1.0, 1.0, 2

    root = jax.random.PRNGKey(0)
    kx, kp = jax.random.split(root)
    x = jax.random.normal(kx, (B, OBS), jnp.float32)
    params = _init_params(kp, OBS, HID)

    out = jax.block_until_ready(hybrid_end2end(x, params, k=K, dt=DT, g=G, l=L))
    ref = jax.block_until_ready(_ref_forward(x, params, k=K, dt=DT, g=G, l=L))
    assert out.shape == (B, OBS)
    assert bool(jnp.all(jnp.isfinite(out)))
    assert bool(jnp.allclose(out, ref, rtol=1e-4, atol=1e-4)), "mismatch vs JAX reference"

    # also exercise the multi-tile (>=2 grid steps, 128-lane tiles) path
    B2 = 256
    x2 = jax.random.normal(jax.random.PRNGKey(1), (B2, OBS), jnp.float32)
    out2 = jax.block_until_ready(hybrid_end2end(x2, params, k=K, dt=DT, g=G, l=L))
    ref2 = jax.block_until_ready(_ref_forward(x2, params, k=K, dt=DT, g=G, l=L))
    assert bool(jnp.allclose(out2, ref2, rtol=1e-4, atol=1e-4)), "mismatch (tiled grid)"

    print("KERNEL_OK")
</pallas_src>

<mosaic_0001>
module attributes {stable_mosaic.version = 11 : i64} {
  func.func @hybrid_kernel(%arg0: i32, %arg1: memref<12x8xf32, #tpu.memory_space<vmem>>, %arg2: memref<12x32x32xf32, #tpu.memory_space<vmem>>, %arg3: memref<12x8xf32, #tpu.memory_space<vmem>>) attributes {dimension_semantics = [#tpu.dimension_semantics<parallel>], iteration_bounds = array<i64: 1>, scalar_prefetch = 0 : i64, scratch_operands = 0 : i64, tpu.core_type = #tpu.core_type<tc>, window_params = [{transform_indices = @transform_0, window_bounds = array<i64: 12, 8>}, {pipeline_mode = #tpu.pipeline_mode<synchronous>, transform_indices = @transform_1, window_bounds = array<i64: 12, 32, 32>}, {transform_indices = @transform_2, window_bounds = array<i64: 12, 8>}]} {
    %c0 = arith.constant 0 : index
    %c0_0 = arith.constant 0 : index
    %c0_1 = arith.constant 0 : index
    %0 = vector.load %arg2[%c0, %c0_0, %c0_1] : memref<12x32x32xf32, #tpu.memory_space<vmem>>, vector<1x32x32xf32>
    %1 = vector.shape_cast %0 : vector<1x32x32xf32> to vector<32x32xf32>
    %2 = vector.extract_strided_slice %1 {offsets = [0, 0], sizes = [30, 12], strides = [1, 1]} : vector<32x32xf32> to vector<30x12xf32>
    %c1 = arith.constant 1 : index
    %c0_2 = arith.constant 0 : index
    %c0_3 = arith.constant 0 : index
    %3 = vector.load %arg2[%c1, %c0_2, %c0_3] : memref<12x32x32xf32, #tpu.memory_space<vmem>>, vector<1x32x32xf32>
    %4 = vector.shape_cast %3 : vector<1x32x32xf32> to vector<32x32xf32>
    %5 = vector.extract_strided_slice %4 {offsets = [0, 0], sizes = [30, 1], strides = [1, 1]} : vector<32x32xf32> to vector<30x1xf32>
    %c2 = arith.constant 2 : index
    %c0_4 = arith.constant 0 : index
    %c0_5 = arith.constant 0 : index
    %6 = vector.load %arg2[%c2, %c0_4, %c0_5] : memref<12x32x32xf32, #tpu.memory_space<vmem>>, vector<1x32x32xf32>
    %7 = vector.shape_cast %6 : vector<1x32x32xf32> to vector<32x32xf32>
    %8 = vector.extract_strided_slice %7 {offsets = [0, 0], sizes = [3, 30], strides = [1, 1]} : vector<32x32xf32> to vector<3x30xf32>
    %c3 = arith.constant 3 : index
    %c0_6 = arith.constant 0 : index
    %c0_7 = arith.constant 0 : index
    %9 = vector.load %arg2[%c3, %c0_6, %c0_7] : memref<12x32x32xf32, #tpu.memory_space<vmem>>, vector<1x32x32xf32>
    %10 = vector.shape_cast %9 : vector<1x32x32xf32> to vector<32x32xf32>
    %11 = vector.extract_strided_slice %10 {offsets = [0, 0], sizes = [3, 1], strides = [1, 1]} : vector<32x32xf32> to vector<3x1xf32>
    %c4 = arith.constant 4 : index
    %c0_8 = arith.constant 0 : index
    %c0_9 = arith.constant 0 : index
    %12 = vector.load %arg2[%c4, %c0_8, %c0_9] : memref<12x32x32xf32, #tpu.memory_space<vmem>>, vector<1x32x32xf32>
    %13 = vector.shape_cast %12 : vector<1x32x32xf32> to vector<32x32xf32>
    %14 = vector.extract_strided_slice %13 {offsets = [0, 0], sizes = [30, 3], strides = [1, 1]} : vector<32x32xf32> to vector<30x3xf32>
    %c5 = arith.constant 5 : index
    %c0_10 = arith.constant 0 : index
    %c0_11 = arith.constant 0 : index
    %15 = vector.load %arg2[%c5, %c0_10, %c0_11] : memref<12x32x32xf32, #tpu.memory_space<vmem>>, vector<1x32x32xf32>
    %16 = vector.shape_cast %15 : vector<1x32x32xf32> to vector<32x32xf32>
    %17 = vector.extract_strided_slice %16 {offsets = [0, 0], sizes = [30, 1], strides = [1, 1]} : vector<32x32xf32> to vector<30x1xf32>
    %c6 = arith.constant 6 : index
    %c0_12 = arith.constant 0 : index
    %c0_13 = arith.constant 0 : index
    %18 = vector.load %arg2[%c6, %c0_12, %c0_13] : memref<12x32x32xf32, #tpu.memory_space<vmem>>, vector<1x32x32xf32>
    %19 = vector.shape_cast %18 : vector<1x32x32xf32> to vector<32x32xf32>
    %20 = vector.extract_strided_slice %19 {offsets = [0, 0], sizes = [3, 30], strides = [1, 1]} : vector<32x32xf32> to vector<3x30xf32>
    %c7 = arith.constant 7 : index
    %c0_14 = arith.constant 0 : index
    %c0_15 = arith.constant 0 : index
    %21 = vector.load %arg2[%c7, %c0_14, %c0_15] : memref<12x32x32xf32, #tpu.memory_space<vmem>>, vector<1x32x32xf32>
    %22 = vector.shape_cast %21 : vector<1x32x32xf32> to vector<32x32xf32>
    %23 = vector.extract_strided_slice %22 {offsets = [0, 0], sizes = [3, 1], strides = [1, 1]} : vector<32x32xf32> to vector<3x1xf32>
    %c8 = arith.constant 8 : index
    %c0_16 = arith.constant 0 : index
    %c0_17 = arith.constant 0 : index
    %24 = vector.load %arg2[%c8, %c0_16, %c0_17] : memref<12x32x32xf32, #tpu.memory_space<vmem>>, vector<1x32x32xf32>
    %25 = vector.shape_cast %24 : vector<1x32x32xf32> to vector<32x32xf32>
    %26 = vector.extract_strided_slice %25 {offsets = [0, 0], sizes = [30, 3], strides = [1, 1]} : vector<32x32xf32> to vector<30x3xf32>
    %c9 = arith.constant 9 : index
    %c0_18 = arith.constant 0 : index
    %c0_19 = arith.constant 0 : index
    %27 = vector.load %arg2[%c9, %c0_18, %c0_19] : memref<12x32x32xf32, #tpu.memory_space<vmem>>, vector<1x32x32xf32>
    %28 = vector.shape_cast %27 : vector<1x32x32xf32> to vector<32x32xf32>
    %29 = vector.extract_strided_slice %28 {offsets = [0, 0], sizes = [30, 1], strides = [1, 1]} : vector<32x32xf32> to vector<30x1xf32>
    %c10 = arith.constant 10 : index
    %c0_20 = arith.constant 0 : index
    %c0_21 = arith.constant 0 : index
    %30 = vector.load %arg2[%c10, %c0_20, %c0_21] : memref<12x32x32xf32, #tpu.memory_space<vmem>>, vector<1x32x32xf32>
    %31 = vector.shape_cast %30 : vector<1x32x32xf32> to vector<32x32xf32>
    %32 = vector.extract_strided_slice %31 {offsets = [0, 0], sizes = [12, 30], strides = [1, 1]} : vector<32x32xf32> to vector<12x30xf32>
    %c11 = arith.constant 11 : index
    %c0_22 = arith.constant 0 : index
    %c0_23 = arith.constant 0 : index
    %33 = vector.load %arg2[%c11, %c0_22, %c0_23] : memref<12x32x32xf32, #tpu.memory_space<vmem>>, vector<1x32x32xf32>
    %34 = vector.shape_cast %33 : vector<1x32x32xf32> to vector<32x32xf32>
    %35 = vector.extract_strided_slice %34 {offsets = [0, 0], sizes = [12, 1], strides = [1, 1]} : vector<32x32xf32> to vector<12x1xf32>
    %c0_24 = arith.constant 0 : index
    %c0_25 = arith.constant 0 : index
    %36 = vector.load %arg1[%c0_24, %c0_25] : memref<12x8xf32, #tpu.memory_space<vmem>>, vector<12x8xf32>
    %cst = arith.constant dense<0.000000e+00> : vector<30x8xf32>
    %37 = tpu.matmul %2, %36, %cst {dimension_numbers = #tpu.dot_dimension_numbers<[1], [0], [0], [1], [0, 0, 1, 1], [], []>} : vector<30x12xf32>, vector<12x8xf32>, vector<30x8xf32> -> vector<30x8xf32>
    %38 = vector.broadcast %5 : vector<30x1xf32> to vector<30x8xf32>
    %39 = arith.addf %37, %38 : vector<30x8xf32>
    %cst_26 = arith.constant 0.000000e+00 : f32
    %40 = vector.broadcast %cst_26 : f32 to vector<30x8xf32>
    %41 = arith.maximumf %39, %40 : vector<30x8xf32>
    %cst_27 = arith.constant dense<0.000000e+00> : vector<3x8xf32>
    %42 = tpu.matmul %8, %41, %cst_27 {dimension_numbers = #tpu.dot_dimension_numbers<[1], [0], [0], [1], [0, 0, 1, 1], [], []>} : vector<3x30xf32>, vector<30x8xf32>, vector<3x8xf32> -> vector<3x8xf32>
    %43 = vector.broadcast %11 : vector<3x1xf32> to vector<3x8xf32>
    %44 = arith.addf %42, %43 : vector<3x8xf32>
    %45 = vector.extract_strided_slice %44 {offsets = [0, 0], sizes = [1, 8], strides = [1, 1]} : vector<3x8xf32> to vector<1x8xf32>
    %46 = vector.extract_strided_slice %44 {offsets = [1, 0], sizes = [1, 8], strides = [1, 1]} : vector<3x8xf32> to vector<1x8xf32>
    %47 = vector.extract_strided_slice %44 {offsets = [2, 0], sizes = [1, 8], strides = [1, 1]} : vector<3x8xf32> to vector<1x8xf32>
    %48 = arith.mulf %45, %45 : vector<1x8xf32>
    %49 = arith.mulf %46, %46 : vector<1x8xf32>
    %50 = arith.addf %48, %49 : vector<1x8xf32>
    %cst_28 = arith.constant 1.000000e-30 : f32
    %51 = vector.broadcast %cst_28 : f32 to vector<1x8xf32>
    %52 = arith.cmpf ogt, %50, %51 : vector<1x8xf32>
    %cst_29 = arith.constant 1.000000e+00 : f32
    %53 = vector.broadcast %cst_29 : f32 to vector<1x8xf32>
    %54 = arith.select %52, %50, %53 : vector<1x8xi1>, vector<1x8xf32>
    %55 = math.rsqrt %54 : vector<1x8xf32>
    %56 = arith.mulf %45, %55 : vector<1x8xf32>
    %cst_30 = arith.constant 1.000000e+00 : f32
    %57 = vector.broadcast %cst_30 : f32 to vector<1x8xf32>
    %58 = arith.select %52, %56, %57 : vector<1x8xi1>, vector<1x8xf32>
    %59 = arith.mulf %46, %55 : vector<1x8xf32>
    %cst_31 = arith.constant 0.000000e+00 : f32
    %60 = vector.broadcast %cst_31 : f32 to vector<1x8xf32>
    %61 = arith.select %52, %59, %60 : vector<1x8xi1>, vector<1x8xf32>
    %cst_32 = arith.constant 1.000000e-01 : f32
    %62 = vector.broadcast %cst_32 : f32 to vector<1x8xf32>
    %63 = arith.mulf %62, %61 : vector<1x8xf32>
    %64 = arith.subf %47, %63 : vector<1x8xf32>
    %cst_33 = arith.constant 1.000000e-01 : f32
    %65 = vector.broadcast %cst_33 : f32 to vector<1x8xf32>
    %66 = arith.mulf %65, %64 : vector<1x8xf32>
    %67 = math.cos %66 : vector<1x8xf32>
    %68 = math.sin %66 : vector<1x8xf32>
    %69 = arith.mulf %58, %67 : vector<1x8xf32>
    %70 = arith.mulf %61, %68 : vector<1x8xf32>
    %71 = arith.subf %69, %70 : vector<1x8xf32>
    %72 = arith.mulf %61, %67 : vector<1x8xf32>
    %73 = arith.mulf %58, %68 : vector<1x8xf32>
    %74 = arith.addf %72, %73 : vector<1x8xf32>
    %75 = tpu.concatenate %71, %74, %64 in 0 : vector<1x8xf32>, vector<1x8xf32>, vector<1x8xf32> -> vector<3x8xf32>
    %cst_34 = arith.constant dense<0.000000e+00> : vector<30x8xf32>
    %76 = tpu.matmul %14, %75, %cst_34 {dimension_numbers = #tpu.dot_dimension_numbers<[1], [0], [0], [1], [0, 0, 1, 1], [], []>} : vector<30x3xf32>, vector<3x8xf32>, vector<30x8xf32> -> vector<30x8xf32>
    %77 = vector.broadcast %17 : vector<30x1xf32> to vector<30x8xf32>
    %78 = arith.addf %76, %77 : vector<30x8xf32>
    %cst_35 = arith.constant 0.000000e+00 : f32
    %79 = vector.broadcast %cst_35 : f32 to vector<30x8xf32>
    %80 = arith.maximumf %78, %79 : vector<30x8xf32>
    %cst_36 = arith.constant dense<0.000000e+00> : vector<3x8xf32>
    %81 = tpu.matmul %20, %80, %cst_36 {dimension_numbers = #tpu.dot_dimension_numbers<[1], [0], [0], [1], [0, 0, 1, 1], [], []>} : vector<3x30xf32>, vector<30x8xf32>, vector<3x8xf32> -> vector<3x8xf32>
    %82 = arith.addf %75, %81 : vector<3x8xf32>
    %83 = vector.broadcast %23 : vector<3x1xf32> to vector<3x8xf32>
    %84 = arith.addf %82, %83 : vector<3x8xf32>
    %85 = vector.extract_strided_slice %84 {offsets = [0, 0], sizes = [1, 8], strides = [1, 1]} : vector<3x8xf32> to vector<1x8xf32>
    %86 = vector.extract_strided_slice %84 {offsets = [1, 0], sizes = [1, 8], strides = [1, 1]} : vector<3x8xf32> to vector<1x8xf32>
    %87 = vector.extract_strided_slice %84 {offsets = [2, 0], sizes = [1, 8], strides = [1, 1]} : vector<3x8xf32> to vector<1x8xf32>
    %88 = arith.mulf %85, %85 : vector<1x8xf32>
    %89 = arith.mulf %86, %86 : vector<1x8xf32>
    %90 = arith.addf %88, %89 : vector<1x8xf32>
    %cst_37 = arith.constant 1.000000e-30 : f32
    %91 = vector.broadcast %cst_37 : f32 to vector<1x8xf32>
    %92 = arith.cmpf ogt, %90, %91 : vector<1x8xf32>
    %cst_38 = arith.constant 1.000000e+00 : f32
    %93 = vector.broadcast %cst_38 : f32 to vector<1x8xf32>
    %94 = arith.select %92, %90, %93 : vector<1x8xi1>, vector<1x8xf32>
    %95 = math.rsqrt %94 : vector<1x8xf32>
    %96 = arith.mulf %85, %95 : vector<1x8xf32>
    %cst_39 = arith.constant 1.000000e+00 : f32
    %97 = vector.broadcast %cst_39 : f32 to vector<1x8xf32>
    %98 = arith.select %92, %96, %97 : vector<1x8xi1>, vector<1x8xf32>
    %99 = arith.mulf %86, %95 : vector<1x8xf32>
    %cst_40 = arith.constant 0.000000e+00 : f32
    %100 = vector.broadcast %cst_40 : f32 to vector<1x8xf32>
    %101 = arith.select %92, %99, %100 : vector<1x8xi1>, vector<1x8xf32>
    %cst_41 = arith.constant 1.000000e-01 : f32
    %102 = vector.broadcast %cst_41 : f32 to vector<1x8xf32>
    %103 = arith.mulf %102, %101 : vector<1x8xf32>
    %104 = arith.subf %87, %103 : vector<1x8xf32>
    %cst_42 = arith.constant 1.000000e-01 : f32
    %105 = vector.broadcast %cst_42 : f32 to vector<1x8xf32>
    %106 = arith.mulf %105, %104 : vector<1x8xf32>
    %107 = math.cos %106 : vector<1x8xf32>
    %108 = math.sin %106 : vector<1x8xf32>
    %109 = arith.mulf %98, %107 : vector<1x8xf32>
    %110 = arith.mulf %101, %108 : vector<1x8xf32>
    %111 = arith.subf %109, %110 : vector<1x8xf32>
    %112 = arith.mulf %101, %107 : vector<1x8xf32>
    %113 = arith.mulf %98, %108 : vector<1x8xf32>
    %114 = arith.addf %112, %113 : vector<1x8xf32>
    %115 = tpu.concatenate %111, %114, %104 in 0 : vector<1x8xf32>, vector<1x8xf32>, vector<1x8xf32> -> vector<3x8xf32>
    %cst_43 = arith.constant dense<0.000000e+00> : vector<30x8xf32>
    %116 = tpu.matmul %14, %115, %cst_43 {dimension_numbers = #tpu.dot_dimension_numbers<[1], [0], [0], [1], [0, 0, 1, 1], [], []>} : vector<30x3xf32>, vector<3x8xf32>, vector<30x8xf32> -> vector<30x8xf32>
    %117 = vector.broadcast %17 : vector<30x1xf32> to vector<30x8xf32>
    %118 = arith.addf %116, %117 : vector<30x8xf32>
    %cst_44 = arith.constant 0.000000e+00 : f32
    %119 = vector.broadcast %cst_44 : f32 to vector<30x8xf32>
    %120 = arith.maximumf %118, %119 : vector<30x8xf32>
    %cst_45 = arith.constant dense<0.000000e+00> : vector<3x8xf32>
    %121 = tpu.matmul %20, %120, %cst_45 {dimension_numbers = #tpu.dot_dimension_numbers<[1], [0], [0], [1], [0, 0, 1, 1], [], []>} : vector<3x30xf32>, vector<30x8xf32>, vector<3x8xf32> -> vector<3x8xf32>
    %122 = arith.addf %115, %121 : vector<3x8xf32>
    %123 = vector.broadcast %23 : vector<3x1xf32> to vector<3x8xf32>
    %124 = arith.addf %122, %123 : vector<3x8xf32>
    %cst_46 = arith.constant dense<0.000000e+00> : vector<30x8xf32>
    %125 = tpu.matmul %26, %124, %cst_46 {dimension_numbers = #tpu.dot_dimension_numbers<[1], [0], [0], [1], [0, 0, 1, 1], [], []>} : vector<30x3xf32>, vector<3x8xf32>, vector<30x8xf32> -> vector<30x8xf32>
    %126 = vector.broadcast %29 : vector<30x1xf32> to vector<30x8xf32>
    %127 = arith.addf %125, %126 : vector<30x8xf32>
    %cst_47 = arith.constant 0.000000e+00 : f32
    %128 = vector.broadcast %cst_47 : f32 to vector<30x8xf32>
    %129 = arith.maximumf %127, %128 : vector<30x8xf32>
    %cst_48 = arith.constant dense<0.000000e+00> : vector<12x8xf32>
    %130 = tpu.matmul %32, %129, %cst_48 {dimension_numbers = #tpu.dot_dimension_numbers<[1], [0], [0], [1], [0, 0, 1, 1], [], []>} : vector<12x30xf32>, vector<30x8xf32>, vector<12x8xf32> -> vector<12x8xf32>
    %131 = vector.broadcast %35 : vector<12x1xf32> to vector<12x8xf32>
    %132 = arith.addf %130, %131 : vector<12x8xf32>
    %cst_49 = arith.constant dense<0.000000e+00> : vector<30x8xf32>
    %133 = tpu.matmul %2, %132, %cst_49 {dimension_numbers = #tpu.dot_dimension_numbers<[1], [0], [0], [1], [0, 0, 1, 1], [], []>} : vector<30x12xf32>, vector<12x8xf32>, vector<30x8xf32> -> vector<30x8xf32>
    %134 = vector.broadcast %5 : vector<30x1xf32> to vector<30x8xf32>
    %135 = arith.addf %133, %134 : vector<30x8xf32>
    %cst_50 = arith.constant 0.000000e+00 : f32
    %136 = vector.broadcast %cst_50 : f32 to vector<30x8xf32>
    %137 = arith.maximumf %135, %136 : vector<30x8xf32>
    %cst_51 = arith.constant dense<0.000000e+00> : vector<3x8xf32>
    %138 = tpu.matmul %8, %137, %cst_51 {dimension_numbers = #tpu.dot_dimension_numbers<[1], [0], [0], [1], [0, 0, 1, 1], [], []>} : vector<3x30xf32>, vector<30x8xf32>, vector<3x8xf32> -> vector<3x8xf32>
    %139 = vector.broadcast %11 : vector<3x1xf32> to vector<3x8xf32>
    %140 = arith.addf %138, %139 : vector<3x8xf32>
    %141 = vector.extract_strided_slice %140 {offsets = [0, 0], sizes = [1, 8], strides = [1, 1]} : vector<3x8xf32> to vector<1x8xf32>
    %142 = vector.extract_strided_slice %140 {offsets = [1, 0], sizes = [1, 8], strides = [1, 1]} : vector<3x8xf32> to vector<1x8xf32>
    %143 = vector.extract_strided_slice %140 {offsets = [2, 0], sizes = [1, 8], strides = [1, 1]} : vector<3x8xf32> to vector<1x8xf32>
    %144 = arith.mulf %141, %141 : vector<1x8xf32>
    %145 = arith.mulf %142, %142 : vector<1x8xf32>
    %146 = arith.addf %144, %145 : vector<1x8xf32>
    %cst_52 = arith.constant 1.000000e-30 : f32
    %147 = vector.broadcast %cst_52 : f32 to vector<1x8xf32>
    %148 = arith.cmpf ogt, %146, %147 : vector<1x8xf32>
    %cst_53 = arith.constant 1.000000e+00 : f32
    %149 = vector.broadcast %cst_53 : f32 to vector<1x8xf32>
    %150 = arith.select %148, %146, %149 : vector<1x8xi1>, vector<1x8xf32>
    %151 = math.rsqrt %150 : vector<1x8xf32>
    %152 = arith.mulf %141, %151 : vector<1x8xf32>
    %cst_54 = arith.constant 1.000000e+00 : f32
    %153 = vector.broadcast %cst_54 : f32 to vector<1x8xf32>
    %154 = arith.select %148, %152, %153 : vector<1x8xi1>, vector<1x8xf32>
    %155 = arith.mulf %142, %151 : vector<1x8xf32>
    %cst_55 = arith.constant 0.000000e+00 : f32
    %156 = vector.broadcast %cst_55 : f32 to vector<1x8xf32>
    %157 = arith.select %148, %155, %156 : vector<1x8xi1>, vector<1x8xf32>
    %cst_56 = arith.constant 1.000000e-01 : f32
    %158 = vector.broadcast %cst_56 : f32 to vector<1x8xf32>
    %159 = arith.mulf %158, %157 : vector<1x8xf32>
    %160 = arith.subf %143, %159 : vector<1x8xf32>
    %cst_57 = arith.constant 1.000000e-01 : f32
    %161 = vector.broadcast %cst_57 : f32 to vector<1x8xf32>
    %162 = arith.mulf %161, %160 : vector<1x8xf32>
    %163 = math.cos %162 : vector<1x8xf32>
    %164 = math.sin %162 : vector<1x8xf32>
    %165 = arith.mulf %154, %163 : vector<1x8xf32>
    %166 = arith.mulf %157, %164 : vector<1x8xf32>
    %167 = arith.subf %165, %166 : vector<1x8xf32>
    %168 = arith.mulf %157, %163 : vector<1x8xf32>
    %169 = arith.mulf %154, %164 : vector<1x8xf32>
    %170 = arith.addf %168, %169 : vector<1x8xf32>
    %171 = tpu.concatenate %167, %170, %160 in 0 : vector<1x8xf32>, vector<1x8xf32>, vector<1x8xf32> -> vector<3x8xf32>
    %cst_58 = arith.constant dense<0.000000e+00> : vector<30x8xf32>
    %172 = tpu.matmul %14, %171, %cst_58 {dimension_numbers = #tpu.dot_dimension_numbers<[1], [0], [0], [1], [0, 0, 1, 1], [], []>} : vector<30x3xf32>, vector<3x8xf32>, vector<30x8xf32> -> vector<30x8xf32>
    %173 = vector.broadcast %17 : vector<30x1xf32> to vector<30x8xf32>
    %174 = arith.addf %172, %173 : vector<30x8xf32>
    %cst_59 = arith.constant 0.000000e+00 : f32
    %175 = vector.broadcast %cst_59 : f32 to vector<30x8xf32>
    %176 = arith.maximumf %174, %175 : vector<30x8xf32>
    %cst_60 = arith.constant dense<0.000000e+00> : vector<3x8xf32>
    %177 = tpu.matmul %20, %176, %cst_60 {dimension_numbers = #tpu.dot_dimension_numbers<[1], [0], [0], [1], [0, 0, 1, 1], [], []>} : vector<3x30xf32>, vector<30x8xf32>, vector<3x8xf32> -> vector<3x8xf32>
    %178 = arith.addf %171, %177 : vector<3x8xf32>
    %179 = vector.broadcast %23 : vector<3x1xf32> to vector<3x8xf32>
    %180 = arith.addf %178, %179 : vector<3x8xf32>
    %181 = vector.extract_strided_slice %180 {offsets = [0, 0], sizes = [1, 8], strides = [1, 1]} : vector<3x8xf32> to vector<1x8xf32>
    %182 = vector.extract_strided_slice %180 {offsets = [1, 0], sizes = [1, 8], strides = [1, 1]} : vector<3x8xf32> to vector<1x8xf32>
    %183 = vector.extract_strided_slice %180 {offsets = [2, 0], sizes = [1, 8], strides = [1, 1]} : vector<3x8xf32> to vector<1x8xf32>
    %184 = arith.mulf %181, %181 : vector<1x8xf32>
    %185 = arith.mulf %182, %182 : vector<1x8xf32>
    %186 = arith.addf %184, %185 : vector<1x8xf32>
    %cst_61 = arith.constant 1.000000e-30 : f32
    %187 = vector.broadcast %cst_61 : f32 to vector<1x8xf32>
    %188 = arith.cmpf ogt, %186, %187 : vector<1x8xf32>
    %cst_62 = arith.constant 1.000000e+00 : f32
    %189 = vector.broadcast %cst_62 : f32 to vector<1x8xf32>
    %190 = arith.select %188, %186, %189 : vector<1x8xi1>, vector<1x8xf32>
    %191 = math.rsqrt %190 : vector<1x8xf32>
    %192 = arith.mulf %181, %191 : vector<1x8xf32>
    %cst_63 = arith.constant 1.000000e+00 : f32
    %193 = vector.broadcast %cst_63 : f32 to vector<1x8xf32>
    %194 = arith.select %188, %192, %193 : vector<1x8xi1>, vector<1x8xf32>
    %195 = arith.mulf %182, %191 : vector<1x8xf32>
    %cst_64 = arith.constant 0.000000e+00 : f32
    %196 = vector.broadcast %cst_64 : f32 to vector<1x8xf32>
    %197 = arith.select %188, %195, %196 : vector<1x8xi1>, vector<1x8xf32>
    %cst_65 = arith.constant 1.000000e-01 : f32
    %198 = vector.broadcast %cst_65 : f32 to vector<1x8xf32>
    %199 = arith.mulf %198, %197 : vector<1x8xf32>
    %200 = arith.subf %183, %199 : vector<1x8xf32>
    %cst_66 = arith.constant 1.000000e-01 : f32
    %201 = vector.broadcast %cst_66 : f32 to vector<1x8xf32>
    %202 = arith.mulf %201, %200 : vector<1x8xf32>
    %203 = math.cos %202 : vector<1x8xf32>
    %204 = math.sin %202 : vector<1x8xf32>
    %205 = arith.mulf %194, %203 : vector<1x8xf32>
    %206 = arith.mulf %197, %204 : vector<1x8xf32>
    %207 = arith.subf %205, %206 : vector<1x8xf32>
    %208 = arith.mulf %197, %203 : vector<1x8xf32>
    %209 = arith.mulf %194, %204 : vector<1x8xf32>
    %210 = arith.addf %208, %209 : vector<1x8xf32>
    %211 = tpu.concatenate %207, %210, %200 in 0 : vector<1x8xf32>, vector<1x8xf32>, vector<1x8xf32> -> vector<3x8xf32>
    %cst_67 = arith.constant dense<0.000000e+00> : vector<30x8xf32>
    %212 = tpu.matmul %14, %211, %cst_67 {dimension_numbers = #tpu.dot_dimension_numbers<[1], [0], [0], [1], [0, 0, 1, 1], [], []>} : vector<30x3xf32>, vector<3x8xf32>, vector<30x8xf32> -> vector<30x8xf32>
    %213 = vector.broadcast %17 : vector<30x1xf32> to vector<30x8xf32>
    %214 = arith.addf %212, %213 : vector<30x8xf32>
    %cst_68 = arith.constant 0.000000e+00 : f32
    %215 = vector.broadcast %cst_68 : f32 to vector<30x8xf32>
    %216 = arith.maximumf %214, %215 : vector<30x8xf32>
    %cst_69 = arith.constant dense<0.000000e+00> : vector<3x8xf32>
    %217 = tpu.matmul %20, %216, %cst_69 {dimension_numbers = #tpu.dot_dimension_numbers<[1], [0], [0], [1], [0, 0, 1, 1], [], []>} : vector<3x30xf32>, vector<30x8xf32>, vector<3x8xf32> -> vector<3x8xf32>
    %218 = arith.addf %211, %217 : vector<3x8xf32>
    %219 = vector.broadcast %23 : vector<3x1xf32> to vector<3x8xf32>
    %220 = arith.addf %218, %219 : vector<3x8xf32>
    %cst_70 = arith.constant dense<0.000000e+00> : vector<30x8xf32>
    %221 = tpu.matmul %26, %220, %cst_70 {dimension_numbers = #tpu.dot_dimension_numbers<[1], [0], [0], [1], [0, 0, 1, 1], [], []>} : vector<30x3xf32>, vector<3x8xf32>, vector<30x8xf32> -> vector<30x8xf32>
    %222 = vector.broadcast %29 : vector<30x1xf32> to vector<30x8xf32>
    %223 = arith.addf %221, %222 : vector<30x8xf32>
    %cst_71 = arith.constant 0.000000e+00 : f32
    %224 = vector.broadcast %cst_71 : f32 to vector<30x8xf32>
    %225 = arith.maximumf %223, %224 : vector<30x8xf32>
    %cst_72 = arith.constant dense<0.000000e+00> : vector<12x8xf32>
    %226 = tpu.matmul %32, %225, %cst_72 {dimension_numbers = #tpu.dot_dimension_numbers<[1], [0], [0], [1], [0, 0, 1, 1], [], []>} : vector<12x30xf32>, vector<30x8xf32>, vector<12x8xf32> -> vector<12x8xf32>
    %227 = vector.broadcast %35 : vector<12x1xf32> to vector<12x8xf32>
    %228 = arith.addf %226, %227 : vector<12x8xf32>
    %c0_73 = arith.constant 0 : index
    %c0_74 = arith.constant 0 : index
    %229 = vector.load %arg3[%c0_73, %c0_74] : memref<12x8xf32, #tpu.memory_space<vmem>>, vector<12x8xf32>
    tpu.vector_store %arg3[%c0_73, %c0_74], %228 {strides = array<i32>} : memref<12x8xf32, #tpu.memory_space<vmem>>, vector<12x8xf32>,
    return
  }
  func.func @transform_0(%arg0: i32) -> (i32, i32) {
    %c0_i32 = arith.constant 0 : i32
    %c0_i32_0 = arith.constant 0 : i32
    return %c0_i32, %arg0 : i32, i32
  }
  func.func @transform_1(%arg0: i32) -> (i32, i32, i32) {
    %c0_i32 = arith.constant 0 : i32
    %c0_i32_0 = arith.constant 0 : i32
    %c0_i32_1 = arith.constant 0 : i32
    %c0_i32_2 = arith.constant 0 : i32
    return %c0_i32, %c0_i32_0, %c0_i32_1 : i32, i32, i32
  }
  func.func @transform_2(%arg0: i32) -> (i32, i32) {
    %c0_i32 = arith.constant 0 : i32
    %c0_i32_0 = arith.constant 0 : i32
    return %c0_i32, %arg0 : i32, i32
  }
}

</mosaic_0001>

<llo_original>
// kernel: tpu_custom_call.1
$region0: #{tpu_custom_call.1}
  #allocation0 [shape = 'u32[]', space=smem, size = 0x4, offset = 0x4, fixed_abs, tag = 'smem constant byte address 0x4 - core index']
  #allocation1 [shape = 'u32[144,128]{1,0:T(1,128)}', space=vmem, size = 0x12000, scoped, tag = 'internal scratch']
  %s0 = inlined_call_operand.vmem [shape: f32[12,8], index: 0, kind: input, shape index: {}]
  %s1 = inlined_call_operand.hbm [shape: f32[12,32,32], index: 1, kind: input, shape index: {}]
  %s2 = inlined_call_operand.vmem [shape: f32[12,8], index: 2, kind: output, shape index: {}]
  %s3 = sld [smem:[#allocation0]]
  $region22: #{tpu_custom_call.1} parent=0
    _
  %s5 = ssub.s32 1, %s3
  %s6 = scalar_select 0, %s5, %s3
  $region1: #{tpu_custom_call.1} parent=0
    #allocation2 [shape = 'u8[196608]{0}', space=vmem, size = 0x30000, scoped, tag = 'input window, operand 1, single buffered']
    #allocation3 [shape = 's32[1]{0}', space=sflag, size = 0x4, scoped, tag = 'scoped memory for tpu_custom_call.1']
    %7 = vsyncpa [#allocation3], 0
    // Predicated region
    $region2: #{tpu_custom_call.1} parent=1 // pred_check
      _
    $region3: #{tpu_custom_call.1} parent=1 // pred_check_branch
      %9 = sbr.rel (0) target = $region5
    $region4: #{tpu_custom_call.1} parent=1 // pred_region
      _
    $region5: #{tpu_custom_call.1} parent=1 // pred_fallthru
      _
    // Predicated region
    $region6: #{tpu_custom_call.1} parent=1 // pred_check
      _
    $region7: #{tpu_custom_call.1} parent=1 // pred_check_branch
      %11 = sbr.rel (0) target = $region9
    $region8: #{tpu_custom_call.1} parent=1 // pred_region
      %s13 = ssub.s32 6144, 6144
      %14 = vsyncadd [#allocation3], %s13
      %s15 = sshll.u32 [#allocation2], 4
      %s16 = int_to_ptr.vmem [resolvable:$true] %s15
      %21 = dma.hbm_to_vmem [thread:$0]  %s1, 6144, %s16, [#allocation3], 128, 128, 8
    $region9: #{tpu_custom_call.1} parent=1 // pred_fallthru
      _
    // Predicated region
    $region10: #{tpu_custom_call.1} parent=1 // pred_check
      _
    $region11: #{tpu_custom_call.1} parent=1 // pred_check_branch
      %23 = sbr.rel (0) target = $region13
    $region12: #{tpu_custom_call.1} parent=1 // pred_region
      %24 = dma.done [#allocation3], 6144
    $region13: #{tpu_custom_call.1} parent=1 // pred_fallthru
      _
    %v25 = vld [vmem:[#allocation2] sm:$0xff]
    %v26 = vld [vmem:[#allocation2 + $0x8] sm:$0xff]
    %v27 = vld [vmem:[#allocation2 + $0x10] sm:$0xff]
    %v28 = vld [vmem:[#allocation2 + $0x18] sm:$0xff]
    %s29 = scalar_lea.vmem [#allocation2], 32
    %v30 = vld [vmem:[%s29] sm:$0xff]
    %v31 = vld [vmem:[%s29 + $0x8] sm:$0xff]
    %v32 = vld [vmem:[%s29 + $0x10] sm:$0xff]
    %v33 = vld [vmem:[%s29 + $0x18] sm:$0xff]
    %s34 = scalar_lea.vmem [#allocation2], 64
    %v35 = vld [vmem:[%s34] sm:$0xff]
    %s36 = scalar_lea.vmem [#allocation2], 96
    %v37 = vld [vmem:[%s36] sm:$0xff]
    %s38 = scalar_lea.vmem [#allocation2], 128
    %v39 = vld [vmem:[%s38] sm:$0xff]
    %v40 = vld [vmem:[%s38 + $0x8] sm:$0xff]
    %v41 = vld [vmem:[%s38 + $0x10] sm:$0xff]
    %v42 = vld [vmem:[%s38 + $0x18] sm:$0xff]
    %s43 = scalar_lea.vmem [#allocation2], 160
    %v44 = vld [vmem:[%s43] sm:$0xff]
    %v45 = vld [vmem:[%s43 + $0x8] sm:$0xff]
    %v46 = vld [vmem:[%s43 + $0x10] sm:$0xff]
    %v47 = vld [vmem:[%s43 + $0x18] sm:$0xff]
    %s48 = scalar_lea.vmem [#allocation2], 192
    %v49 = vld [vmem:[%s48] sm:$0xff]
    %s50 = scalar_lea.vmem [#allocation2], 224
    %v51 = vld [vmem:[%s50] sm:$0xff]
    %s52 = scalar_lea.vmem [#allocation2], 256
    %v53 = vld [vmem:[%s52] sm:$0xff]
    %v54 = vld [vmem:[%s52 + $0x8] sm:$0xff]
    %v55 = vld [vmem:[%s52 + $0x10] sm:$0xff]
    %v56 = vld [vmem:[%s52 + $0x18] sm:$0xff]
    %s57 = scalar_lea.vmem [#allocation2], 288
    %v58 = vld [vmem:[%s57] sm:$0xff]
    %v59 = vld [vmem:[%s57 + $0x8] sm:$0xff]
    %v60 = vld [vmem:[%s57 + $0x10] sm:$0xff]
    %v61 = vld [vmem:[%s57 + $0x18] sm:$0xff]
    %s62 = scalar_lea.vmem [#allocation2], 320
    %v63 = vld [vmem:[%s62] sm:$0xff]
    %v64 = vld [vmem:[%s62 + $0x8] sm:$0xff]
    %s65 = scalar_lea.vmem [#allocation2], 352
    %v66 = vld [vmem:[%s65] sm:$0xff]
    %v67 = vld [vmem:[%s65 + $0x8] sm:$0xff]
    %v68 = vld [vmem:[%s0] sm:$0xff]
    %v69 = vld [vmem:[%s0 + $0x8] sm:$0xf]
    %71 = vset.pattern.permute.xlu0 0
    %72 = vperm.xlu0 %71, %v30
    %v73 = vpop.permute.xlu0 %72
    %76 = vset.pattern.permute.xlu0 0
    %77 = vperm.xlu0 %76, %v31
    %v78 = vpop.permute.xlu0 %77
    %81 = vset.pattern.permute.xlu0 0
    %82 = vperm.xlu0 %81, %v32
    %v83 = vpop.permute.xlu0 %82
    %86 = vset.pattern.permute.xlu0 0
    %87 = vperm.xlu0 %86, %v33
    %v88 = vpop.permute.xlu0 %87
    %vm90 = vcmask 97280
    %v92 = vsel %vm90, %v25, 0
    %v95 = vsel %vm90, %v26, 0
    %v98 = vsel %vm90, %v27, 0
    %v101 = vsel %vm90, %v28, 0
    %vm103 = vcmask 1043456
    %v105 = vsel %vm103, %v69, 0
    %107 = vmatprep.subr.mxu0 0.0
    %108 = vmatpush1.msra.mxu0 %v68
    %109 = vmatprep.subr.mxu0 0.0
    %110 = vmatpush1.msra.mxu0 %v105
    %111 = vmatprep.subr.mxu0 0.0
    %112 = vmatpush1.msra.mxu0 0.0
    %113 = vmatprep.subr.mxu0 0.0
    %114 = vmatpush1.msra.mxu0 0.0
    %115 = vmatprep.subr.mxu0 0.0
    %116 = vmatpush1.msra.mxu0 0.0
    %117 = vmatprep.subr.mxu0 0.0
    %118 = vmatpush1.msra.mxu0 0.0
    %119 = vmatprep.subr.mxu0 0.0
    %120 = vmatpush1.msra.mxu0 0.0
    %121 = vmatprep.subr.mxu0 0.0
    %122 = vmatpush1.msra.mxu0 0.0
    %123 = vmatprep.subr.mxu0 0.0
    %124 = vmatpush1.msra.mxu0 0.0
    %125 = vmatprep.subr.mxu0 0.0
    %126 = vmatpush1.msra.mxu0 0.0
    %127 = vmatprep.subr.mxu0 0.0
    %128 = vmatpush1.msra.mxu0 0.0
    %129 = vmatprep.subr.mxu0 0.0
    %130 = vmatpush1.msra.mxu0 0.0
    %131 = vmatprep.subr.mxu0 0.0
    %132 = vmatpush1.msra.mxu0 0.0
    %133 = vmatprep.subr.mxu0 0.0
    %134 = vmatpush1.msra.mxu0 0.0
    %135 = vmatprep.subr.mxu0 0.0
    %136 = vmatpush1.msra.mxu0 0.0
    %137 = vmatprep.subr.mxu0 0.0
    %138 = vmatpush1.msra.mxu0 0.0
    %139 = vmatprep.subr.mxu0 0.0
    %140 = vmatpush1.msra.mxu0 0.0
    %141 = vmatprep.subr.mxu0 0.0
    %142 = vmatpush1.msra.mxu0 0.0
    %143 = vmatprep.subr.mxu0 0.0
    %144 = vmatpush1.msra.mxu0 0.0
    %145 = vmatprep.subr.mxu0 0.0
    %146 = vmatpush1.msra.mxu0 0.0
    %147 = vmatprep.subr.mxu0 0.0
    %148 = vmatpush1.msra.mxu0 0.0
    %149 = vmatprep.subr.mxu0 0.0
    %150 = vmatpush1.msra.mxu0 0.0
    %151 = vmatprep.subr.mxu0 0.0
    %152 = vmatpush1.msra.mxu0 0.0
    %153 = vmatprep.subr.mxu0 0.0
    %154 = vmatpush1.msra.mxu0 0.0
    %155 = vmatprep.subr.mxu0 0.0
    %156 = vmatpush1.msra.mxu0 0.0
    %157 = vmatprep.subr.mxu0 0.0
    %158 = vmatpush1.msra.mxu0 0.0
    %159 = vmatprep.subr.mxu0 0.0
    %160 = vmatpush1.msra.mxu0 0.0
    %161 = vmatprep.subr.mxu0 0.0
    %162 = vmatpush1.msra.mxu0 0.0
    %163 = vmatprep.subr.mxu0 0.0
    %164 = vmatpush1.msra.mxu0 0.0
    %165 = vmatprep.subr.mxu0 0.0
    %166 = vmatpush1.msra.mxu0 0.0
    %167 = vmatprep.subr.mxu0 0.0
    %168 = vmatpush1.msra.mxu0 0.0
    %169 = vmatprep.subr.mxu0 0.0
    %170 = vmatpush1.msra.mxu0 0.0
    %171 = vmatprep.mubr.f32.mxu0 0.0
    %172 = vmatmul.mubr.f32.gmra.mrb[0].mxu0 %v92
    %v173 = vpop.f32.mrb[0].mxu0
    %v174 = vadd.f32 %v73, %v173
    %v175 = vpop.f32.mrb[0].mxu0
    %176 = vmatprep.mubr.f32.mxu0 0.0
    %177 = vmatmul.mubr.f32.gmra.mrb[0].mxu0 %v95
    %v178 = vpop.f32.mrb[0].mxu0
    %v179 = vadd.f32 %v78, %v178
    %v180 = vpop.f32.mrb[0].mxu0
    %181 = vmatprep.mubr.f32.mxu0 0.0
    %182 = vmatmul.mubr.f32.gmra.mrb[0].mxu0 %v98
    %v183 = vpop.f32.mrb[0].mxu0
    %v184 = vadd.f32 %v83, %v183
    %v185 = vpop.f32.mrb[0].mxu0
    %186 = vmatprep.mubr.f32.mxu0 0.0
    %187 = vmatmul.mubr.f32.gmra.mrb[0].mxu0 %v101
    %v188 = vpop.f32.mrb[0].mxu0
    %v189 = vadd.f32 %v88, %v188
    %v190 = vpop.f32.mrb[0].mxu0
    %191 = vdwg.mxu0
    %v192 = vmax.f32 %v174, 0.0
    %v193 = vmax.f32 %v179, 0.0
    %v194 = vmax.f32 %v184, 0.0
    %v195 = vmax.f32 %v189, 0.0
    %197 = vset.pattern.permute.xlu0 0
    %198 = vperm.xlu0 %197, %v37
    %v199 = vpop.permute.xlu0 %198
    %vm201 = vcmask 244736
    %v203 = vsel %vm201, %v35, 0
    %vm205 = vcmask 1045504
    %v207 = vsel %vm205, %v195, 0
    %209 = vmatprep.subr.mxu0 0.0
    %210 = vmatpush1.msra.mxu0 %v192
    %211 = vmatprep.subr.mxu0 0.0
    %212 = vmatpush1.msra.mxu0 %v193
    %213 = vmatprep.subr.mxu0 0.0
    %214 = vmatpush1.msra.mxu0 %v194
    %215 = vmatprep.subr.mxu0 0.0
    %216 = vmatpush1.msra.mxu0 %v207
    %217 = vmatprep.subr.mxu0 0.0
    %218 = vmatpush1.msra.mxu0 0.0
    %219 = vmatprep.subr.mxu0 0.0
    %220 = vmatpush1.msra.mxu0 0.0
    %221 = vmatprep.subr.mxu0 0.0
    %222 = vmatpush1.msra.mxu0 0.0
    %223 = vmatprep.subr.mxu0 0.0
    %224 = vmatpush1.msra.mxu0 0.0
    %225 = vmatprep.subr.mxu0 0.0
    %226 = vmatpush1.msra.mxu0 0.0
    %227 = vmatprep.subr.mxu0 0.0
    %228 = vmatpush1.msra.mxu0 0.0
    %229 = vmatprep.subr.mxu0 0.0
    %230 = vmatpush1.msra.mxu0 0.0
    %231 = vmatprep.subr.mxu0 0.0
    %232 = vmatpush1.msra.mxu0 0.0
    %233 = vmatprep.subr.mxu0 0.0
    %234 = vmatpush1.msra.mxu0 0.0
    %235 = vmatprep.subr.mxu0 0.0
    %236 = vmatpush1.msra.mxu0 0.0
    %237 = vmatprep.subr.mxu0 0.0
    %238 = vmatpush1.msra.mxu0 0.0
    %239 = vmatprep.subr.mxu0 0.0
    %240 = vmatpush1.msra.mxu0 0.0
    %241 = vmatprep.subr.mxu0 0.0
    %242 = vmatpush1.msra.mxu0 0.0
    %243 = vmatprep.subr.mxu0 0.0
    %244 = vmatpush1.msra.mxu0 0.0
    %245 = vmatprep.subr.mxu0 0.0
    %246 = vmatpush1.msra.mxu0 0.0
    %247 = vmatprep.subr.mxu0 0.0
    %248 = vmatpush1.msra.mxu0 0.0
    %249 = vmatprep.subr.mxu0 0.0
    %250 = vmatpush1.msra.mxu0 0.0
    %251 = vmatprep.subr.mxu0 0.0
    %252 = vmatpush1.msra.mxu0 0.0
    %253 = vmatprep.subr.mxu0 0.0
    %254 = vmatpush1.msra.mxu0 0.0
    %255 = vmatprep.subr.mxu0 0.0
    %256 = vmatpush1.msra.mxu0 0.0
    %257 = vmatprep.subr.mxu0 0.0
    %258 = vmatpush1.msra.mxu0 0.0
    %259 = vmatprep.subr.mxu0 0.0
    %260 = vmatpush1.msra.mxu0 0.0
    %261 = vmatprep.subr.mxu0 0.0
    %262 = vmatpush1.msra.mxu0 0.0
    %263 = vmatprep.subr.mxu0 0.0
    %264 = vmatpush1.msra.mxu0 0.0
    %265 = vmatprep.subr.mxu0 0.0
    %266 = vmatpush1.msra.mxu0 0.0
    %267 = vmatprep.subr.mxu0 0.0
    %268 = vmatpush1.msra.mxu0 0.0
    %269 = vmatprep.subr.mxu0 0.0
    %270 = vmatpush1.msra.mxu0 0.0
    %271 = vmatprep.subr.mxu0 0.0
    %272 = vmatpush1.msra.mxu0 0.0
    %273 = vmatprep.mubr.f32.mxu0 0.0
    %274 = vmatmul.mubr.f32.gmra.mrb[0].mxu0 %v203
    %v275 = vpop.f32.mrb[0].mxu0
    %v276 = vadd.f32 %v199, %v275
    %v277 = vpop.f32.mrb[0].mxu0
    %278 = vdwg.mxu0
    %v279 = vmul.f32 %v276, %v276
    %v281 = vrot.slane %v279, 1
    %v283 = vadd.f32 %v279, %v281
    %vm284 = vcmp.gt.f32.partialorder %v283, 1e-30
    %v285 = vsel %vm284, %v283, 1.0
    %v286 = vrsqrt.pop %v285
    %v287 = vmul.f32 %v276, %v286
    %v288 = vsel %vm284, %v287, 1.0
    %v290 = vrot.slane %v286, 7
    %v292 = vmul.f32 %v276, %v290
    %v294 = vrot.slane %v292, 1
    %v296 = vsel %vm284, %v294, 0.0
    %v297 = vmul.f32 %v296, 0.1
    %v299 = vrot.slane %v297, 6
    %v301 = vsub.f32 %v276, %v299
    %v302 = vmul.f32 %v301, 0.1
    %v303 = vand.u32 2147483647, %v302
    %vm304 = vcmp.le.f32.partialorder %v303, 0.7853982
    %vm305 = vcmp.lt.s32.totalorder %v302, 0
    %v306 = vand.u32 %v302, 2139095040
    %v307 = vshrl.u32 %v306, 23
    %v308 = vsub.s32 %v307, 127
    %v309 = vand.u32 2147483647, %v302
    %v310 = vand.u32 %v309, 8388607
    %v311 = vor.u32 %v310, 8388608
    %v312 = vsub.s32 0, %v311
    %v313 = vadd.s32 %v308, 1
    %vm314 = vcmp.gt.s32.totalorder %v313, 0
    %v315 = vsel %vm314, %v313, 0
    %v316 = vshrl.u32 %v315, 5
    %v317 = vand.u32 %v315, 31
    %v318 = vsub.s32 32, %v317
    %v319 = vshrl.u32 683565275, %v318
    %v320 = vshll.u32 683565275, %v317
    %v321 = vshrl.u32 2475754826, %v318
    %v322 = vor.u32 %v320, %v321
    %v323 = vshll.u32 2475754826, %v317
    %v324 = vshrl.u32 2131351028, %v318
    %v325 = vor.u32 %v323, %v324
    %v326 = vshll.u32 2131351028, %v317
    %v327 = vshrl.u32 2102212464, %v318
    %v328 = vor.u32 %v326, %v327
    %v329 = vshll.u32 2102212464, %v317
    %v330 = vshrl.u32 920167782, %v318
    %v331 = vor.u32 %v329, %v330
    %v332 = vshll.u32 920167782, %v317
    %v333 = vshrl.u32 1326507024, %v318
    %v334 = vor.u32 %v332, %v333
    %vm335 = vcmp.lt.s32.totalorder %v316, 1
    %vm336 = vcmp.lt.s32.totalorder %v316, 2
    %vm337 = vcmp.lt.s32.totalorder %v316, 3
    %vm338 = vcmp.lt.s32.totalorder %v316, 4
    %v339 = vsel %vm335, %v319, %v322
    %v340 = vsel %vm338, %v328, 2102212464
    %v341 = vsel %vm337, %v325, %v340
    %v342 = vsel %vm336, %v339, %v341
    %v343 = vsel %vm335, %v322, %v325
    %v344 = vsel %vm338, %v331, 920167782
    %v345 = vsel %vm337, %v328, %v344
    %v346 = vsel %vm336, %v343, %v345
    %v347 = vsel %vm335, %v325, %v328
    %v348 = vsel %vm338, %v334, 1326507024
    %v349 = vsel %vm337, %v331, %v348
    %v350 = vsel %vm336, %v347, %v349
    %v351 = vshll.u32 %v311, 8
    %v352 = vmul.u32.u64.compose %v351, %v350
    %v353 = vextract.low.u32 %v352
    %v354 = vextract.high.u32 %v352
    %v355 = vmul.u32.u64.compose %v351, %v346
    %v356 = vextract.low.u32 %v355
    %v357 = vextract.high.u32 %v355
    %v358 = vmul.u32 %v351, %v342
    %v359 = vadd.s32 %v354, %v356
    %vm360 = vc.u32 %v354, %v356
    %v361 = vadd.s32 %v357, 1
    %v362 = vsel %vm360, %v361, %v357
    %v363 = vadd.s32 %v358, %v362
    %v364 = vadd.s32 %v363, 536870912
    %v365 = vshrl.u32 %v364, 30
    %v366 = vshll.u32 %v365, 30
    %v367 = vsub.s32 %v363, %v366
    %vm368 = vcmp.lt.s32.totalorder %v367, 0
    %v369 = vsub.s32 0, %v367
    %v370 = vsel %vm368, %v369, %v367
    %v371 = vclz %v370
    %v372 = vsub.s32 %v371, 2
    %vm373 = vcmp.gt.s32.totalorder 0, %v372
    %v374 = vsel %vm373, 0, %v372
    %v375 = vsub.s32 32, %v374
    %v376 = vshll.u32 %v367, %v374
    %v377 = vshrl.u32 %v359, %v375
    %v378 = vor.u32 %v376, %v377
    %v379 = vsub.s32 4294967266, %v374
    %v380 = vadd.s32 %v379, 127
    %v381 = vshll.u32 %v380, 23
    %v382 = vor.u32 4788187, %v381
    %v383 = vand.u32 2147483647, %v382
    %v385 = vcvt.s32.f32 %v378
    %v386 = vmul.f32 %v385, %v383
    %v387 = vxor.u32 %v386, 2147483648
    %v388 = vsel %vm305, %v387, %v386
    %v389 = vsub.s32 4, %v365
    %v390 = vsel %vm305, %v389, %v365
    %v391 = vsel %vm304, %v302, %v388
    %v392 = vsel %vm304, 0, %v390
    %v393 = vcosq.f32.pop %v391
    %v394 = vsinq.f32.pop %v391
    %vm395 = vweird.f32 %v302
    %v396 = vand.u32 %v392, 3
    %vm397 = vcmp.lt.s32.totalorder %v396, 2
    %vm398 = vcmp.eq.s32.totalorder %v396, 0
    %v399 = vxor.u32 %v394, 2147483648
    %v400 = vsel %vm398, %v393, %v399
    %vm401 = vcmp.eq.s32.totalorder %v396, 2
    %v402 = vxor.u32 %v393, 2147483648
    %v403 = vsel %vm401, %v402, %v394
    %v404 = vsel %vm397, %v400, %v403
    %v405 = vsel %vm395, nan, %v404
    %v406 = vand.u32 2147483647, %v302
    %vm407 = vcmp.le.f32.partialorder %v406, 0.7853982
    %vm408 = vcmp.lt.s32.totalorder %v302, 0
    %v409 = vand.u32 %v302, 2139095040
    %v410 = vshrl.u32 %v409, 23
    %v411 = vsub.s32 %v410, 127
    %v412 = vand.u32 2147483647, %v302
    %v413 = vand.u32 %v412, 8388607
    %v414 = vor.u32 %v413, 8388608
    %v415 = vsub.s32 0, %v414
    %v416 = vadd.s32 %v411, 1
    %vm417 = vcmp.gt.s32.totalorder %v416, 0
    %v418 = vsel %vm417, %v416, 0
    %v419 = vshrl.u32 %v418, 5
    %v420 = vand.u32 %v418, 31
    %v421 = vsub.s32 32, %v420
    %v422 = vshrl.u32 683565275, %v421
    %v423 = vshll.u32 683565275, %v420
    %v424 = vshrl.u32 2475754826, %v421
    %v425 = vor.u32 %v423, %v424
    %v426 = vshll.u32 2475754826, %v420
    %v427 = vshrl.u32 2131351028, %v421
    %v428 = vor.u32 %v426, %v427
    %v429 = vshll.u32 2131351028, %v420
    %v430 = vshrl.u32 2102212464, %v421
    %v431 = vor.u32 %v429, %v430
    %v432 = vshll.u32 2102212464, %v420
    %v433 = vshrl.u32 920167782, %v421
    %v434 = vor.u32 %v432, %v433
    %v435 = vshll.u32 920167782, %v420
    %v436 = vshrl.u32 1326507024, %v421
    %v437 = vor.u32 %v435, %v436
    %vm438 = vcmp.lt.s32.totalorder %v419, 1
    %vm439 = vcmp.lt.s32.totalorder %v419, 2
    %vm440 = vcmp.lt.s32.totalorder %v419, 3
    %vm441 = vcmp.lt.s32.totalorder %v419, 4
    %v442 = vsel %vm438, %v422, %v425
    %v443 = vsel %vm441, %v431, 2102212464
    %v444 = vsel %vm440, %v428, %v443
    %v445 = vsel %vm439, %v442, %v444
    %v446 = vsel %vm438, %v425, %v428
    %v447 = vsel %vm441, %v434, 920167782
    %v448 = vsel %vm440, %v431, %v447
    %v449 = vsel %vm439, %v446, %v448
    %v450 = vsel %vm438, %v428, %v431
    %v451 = vsel %vm441, %v437, 1326507024
    %v452 = vsel %vm440, %v434, %v451
    %v453 = vsel %vm439, %v450, %v452
    %v454 = vshll.u32 %v414, 8
    %v455 = vmul.u32.u64.compose %v454, %v453
    %v456 = vextract.low.u32 %v455
    %v457 = vextract.high.u32 %v455
    %v458 = vmul.u32.u64.compose %v454, %v449
    %v459 = vextract.low.u32 %v458
    %v460 = vextract.high.u32 %v458
    %v461 = vmul.u32 %v454, %v445
    %v462 = vadd.s32 %v457, %v459
    %vm463 = vc.u32 %v457, %v459
    %v464 = vadd.s32 %v460, 1
    %v465 = vsel %vm463, %v464, %v460
    %v466 = vadd.s32 %v461, %v465
    %v467 = vadd.s32 %v466, 536870912
    %v468 = vshrl.u32 %v467, 30
    %v469 = vshll.u32 %v468, 30
    %v470 = vsub.s32 %v466, %v469
    %vm471 = vcmp.lt.s32.totalorder %v470, 0
    %v472 = vsub.s32 0, %v470
    %v473 = vsel %vm471, %v472, %v470
    %v474 = vclz %v473
    %v475 = vsub.s32 %v474, 2
    %vm476 = vcmp.gt.s32.totalorder 0, %v475
    %v477 = vsel %vm476, 0, %v475
    %v478 = vsub.s32 32, %v477
    %v479 = vshll.u32 %v470, %v477
    %v480 = vshrl.u32 %v462, %v478
    %v481 = vor.u32 %v479, %v480
    %v482 = vsub.s32 4294967266, %v477
    %v483 = vadd.s32 %v482, 127
    %v484 = vshll.u32 %v483, 23
    %v485 = vor.u32 4788187, %v484
    %v486 = vand.u32 2147483647, %v485
    %v488 = vcvt.s32.f32 %v481
    %v489 = vmul.f32 %v488, %v486
    %v490 = vxor.u32 %v489, 2147483648
    %v491 = vsel %vm408, %v490, %v489
    %v492 = vsub.s32 4, %v468
    %v493 = vsel %vm408, %v492, %v468
    %v494 = vsel %vm407, %v302, %v491
    %v495 = vsel %vm407, 0, %v493
    %v496 = vcosq.f32.pop %v494
    %v497 = vsinq.f32.pop %v494
    %vm498 = vweird.f32 %v302
    %v499 = vadd.s32 %v495, 3
    %v500 = vand.u32 %v499, 3
    %vm501 = vcmp.lt.s32.totalorder %v500, 2
    %vm502 = vcmp.eq.s32.totalorder %v500, 0
    %v503 = vxor.u32 %v497, 2147483648
    %v504 = vsel %vm502, %v496, %v503
    %vm505 = vcmp.eq.s32.totalorder %v500, 2
    %v506 = vxor.u32 %v496, 2147483648
    %v507 = vsel %vm505, %v506, %v497
    %v508 = vsel %vm501, %v504, %v507
    %v509 = vsel %vm498, nan, %v508
    %v511 = vrot.slane %v405, 2
    %v513 = vmul.f32 %v288, %v511
    %v515 = vrot.slane %v509, 2
    %v517 = vmul.f32 %v296, %v515
    %v518 = vsub.f32 %v513, %v517
    %v519 = vmul.f32 %v296, %v511
    %v520 = vmul.f32 %v288, %v515
    %v521 = vadd.f32 %v519, %v520
    %v523 = vrot.slane %v521, 7
    %vm525 = vcmask 1040384
    %v526 = vsel %vm525, %v518, %v523
    %vm527 = vcmask 1041408
    %v528 = vsel %vm527, %v526, %v301
    %530 = vset.pattern.permute.xlu0 0
    %531 = vperm.xlu0 %530, %v44
    %v532 = vpop.permute.xlu0 %531
    %535 = vset.pattern.permute.xlu0 0
    %536 = vperm.xlu0 %535, %v45
    %v537 = vpop.permute.xlu0 %536
    %540 = vset.pattern.permute.xlu0 0
    %541 = vperm.xlu0 %540, %v46
    %v542 = vpop.permute.xlu0 %541
    %545 = vset.pattern.permute.xlu0 0
    %546 = vperm.xlu0 %545, %v47
    %v547 = vpop.permute.xlu0 %546
    %vm549 = vcmask 23552
    %v551 = vsel %vm549, %v39, 0
    %v554 = vsel %vm549, %v40, 0
    %v557 = vsel %vm549, %v41, 0
    %v560 = vsel %vm549, %v42, 0
    %vm562 = vcmask 1042432
    %v564 = vsel %vm562, %v528, 0
    %566 = vmatprep.subr.mxu0 0.0
    %567 = vmatpush1.msra.mxu0 %v564
    %568 = vmatprep.subr.mxu0 0.0
    %569 = vmatpush1.msra.mxu0 0.0
    %570 = vmatprep.subr.mxu0 0.0
    %571 = vmatpush1.msra.mxu0 0.0
    %572 = vmatprep.subr.mxu0 0.0
    %573 = vmatpush1.msra.mxu0 0.0
    %574 = vmatprep.subr.mxu0 0.0
    %575 = vmatpush1.msra.mxu0 0.0
    %576 = vmatprep.subr.mxu0 0.0
    %577 = vmatpush1.msra.mxu0 0.0
    %578 = vmatprep.subr.mxu0 0.0
    %579 = vmatpush1.msra.mxu0 0.0
    %580 = vmatprep.subr.mxu0 0.0
    %581 = vmatpush1.msra.mxu0 0.0
    %582 = vmatprep.subr.mxu0 0.0
    %583 = vmatpush1.msra.mxu0 0.0
    %584 = vmatprep.subr.mxu0 0.0
    %585 = vmatpush1.msra.mxu0 0.0
    %586 = vmatprep.subr.mxu0 0.0
    %587 = vmatpush1.msra.mxu0 0.0
    %588 = vmatprep.subr.mxu0 0.0
    %589 = vmatpush1.msra.mxu0 0.0
    %590 = vmatprep.subr.mxu0 0.0
    %591 = vmatpush1.msra.mxu0 0.0
    %592 = vmatprep.subr.mxu0 0.0
    %593 = vmatpush1.msra.mxu0 0.0
    %594 = vmatprep.subr.mxu0 0.0
    %595 = vmatpush1.msra.mxu0 0.0
    %596 = vmatprep.subr.mxu0 0.0
    %597 = vmatpush1.msra.mxu0 0.0
    %598 = vmatprep.subr.mxu0 0.0
    %599 = vmatpush1.msra.mxu0 0.0
    %600 = vmatprep.subr.mxu0 0.0
    %601 = vmatpush1.msra.mxu0 0.0
    %602 = vmatprep.subr.mxu0 0.0
    %603 = vmatpush1.msra.mxu0 0.0
    %604 = vmatprep.subr.mxu0 0.0
    %605 = vmatpush1.msra.mxu0 0.0
    %606 = vmatprep.subr.mxu0 0.0
    %607 = vmatpush1.msra.mxu0 0.0
    %608 = vmatprep.subr.mxu0 0.0
    %609 = vmatpush1.msra.mxu0 0.0
    %610 = vmatprep.subr.mxu0 0.0
    %611 = vmatpush1.msra.mxu0 0.0
    %612 = vmatprep.subr.mxu0 0.0
    %613 = vmatpush1.msra.mxu0 0.0
    %614 = vmatprep.subr.mxu0 0.0
    %615 = vmatpush1.msra.mxu0 0.0
    %616 = vmatprep.subr.mxu0 0.0
    %617 = vmatpush1.msra.mxu0 0.0
    %618 = vmatprep.subr.mxu0 0.0
    %619 = vmatpush1.msra.mxu0 0.0
    %620 = vmatprep.subr.mxu0 0.0
    %621 = vmatpush1.msra.mxu0 0.0
    %622 = vmatprep.subr.mxu0 0.0
    %623 = vmatpush1.msra.mxu0 0.0
    %624 = vmatprep.subr.mxu0 0.0
    %625 = vmatpush1.msra.mxu0 0.0
    %626 = vmatprep.subr.mxu0 0.0
    %627 = vmatpush1.msra.mxu0 0.0
    %628 = vmatprep.subr.mxu0 0.0
    %629 = vmatpush1.msra.mxu0 0.0
    %630 = vmatprep.mubr.f32.mxu0 0.0
    %631 = vmatmul.mubr.f32.gmra.mrb[0].mxu0 %v551
    %v632 = vpop.f32.mrb[0].mxu0
    %v633 = vadd.f32 %v532, %v632
    %v634 = vpop.f32.mrb[0].mxu0
    %635 = vmatprep.mubr.f32.mxu0 0.0
    %636 = vmatmul.mubr.f32.gmra.mrb[0].mxu0 %v554
    %v637 = vpop.f32.mrb[0].mxu0
    %v638 = vadd.f32 %v537, %v637
    %v639 = vpop.f32.mrb[0].mxu0
    %640 = vmatprep.mubr.f32.mxu0 0.0
    %641 = vmatmul.mubr.f32.gmra.mrb[0].mxu0 %v557
    %v642 = vpop.f32.mrb[0].mxu0
    %v643 = vadd.f32 %v542, %v642
    %v644 = vpop.f32.mrb[0].mxu0
    %645 = vmatprep.mubr.f32.mxu0 0.0
    %646 = vmatmul.mubr.f32.gmra.mrb[0].mxu0 %v560
    %v647 = vpop.f32.mrb[0].mxu0
    %v648 = vadd.f32 %v547, %v647
    %v649 = vpop.f32.mrb[0].mxu0
    %650 = vdwg.mxu0
    %v651 = vmax.f32 %v633, 0.0
    %v652 = vmax.f32 %v638, 0.0
    %v653 = vmax.f32 %v643, 0.0
    %v654 = vmax.f32 %v648, 0.0
    %v656 = vsel %vm201, %v49, 0
    %v659 = vsel %vm205, %v654, 0
    %661 = vmatprep.subr.mxu0 0.0
    %662 = vmatpush1.msra.mxu0 %v651
    %663 = vmatprep.subr.mxu0 0.0
    %664 = vmatpush1.msra.mxu0 %v652
    %665 = vmatprep.subr.mxu0 0.0
    %666 = vmatpush1.msra.mxu0 %v653
    %667 = vmatprep.subr.mxu0 0.0
    %668 = vmatpush1.msra.mxu0 %v659
    %669 = vmatprep.subr.mxu0 0.0
    %670 = vmatpush1.msra.mxu0 0.0
    %671 = vmatprep.subr.mxu0 0.0
    %672 = vmatpush1.msra.mxu0 0.0
    %673 = vmatprep.subr.mxu0 0.0
    %674 = vmatpush1.msra.mxu0 0.0
    %675 = vmatprep.subr.mxu0 0.0
    %676 = vmatpush1.msra.mxu0 0.0
    %677 = vmatprep.subr.mxu0 0.0
    %678 = vmatpush1.msra.mxu0 0.0
    %679 = vmatprep.subr.mxu0 0.0
    %680 = vmatpush1.msra.mxu0 0.0
    %681 = vmatprep.subr.mxu0 0.0
    %682 = vmatpush1.msra.mxu0 0.0
    %683 = vmatprep.subr.mxu0 0.0
    %684 = vmatpush1.msra.mxu0 0.0
    %685 = vmatprep.subr.mxu0 0.0
    %686 = vmatpush1.msra.mxu0 0.0
    %687 = vmatprep.subr.mxu0 0.0
    %688 = vmatpush1.msra.mxu0 0.0
    %689 = vmatprep.subr.mxu0 0.0
    %690 = vmatpush1.msra.mxu0 0.0
    %691 = vmatprep.subr.mxu0 0.0
    %692 = vmatpush1.msra.mxu0 0.0
    %693 = vmatprep.subr.mxu0 0.0
    %694 = vmatpush1.msra.mxu0 0.0
    %695 = vmatprep.subr.mxu0 0.0
    %696 = vmatpush1.msra.mxu0 0.0
    %697 = vmatprep.subr.mxu0 0.0
    %698 = vmatpush1.msra.mxu0 0.0
    %699 = vmatprep.subr.mxu0 0.0
    %700 = vmatpush1.msra.mxu0 0.0
    %701 = vmatprep.subr.mxu0 0.0
    %702 = vmatpush1.msra.mxu0 0.0
    %703 = vmatprep.subr.mxu0 0.0
    %704 = vmatpush1.msra.mxu0 0.0
    %705 = vmatprep.subr.mxu0 0.0
    %706 = vmatpush1.msra.mxu0 0.0
    %707 = vmatprep.subr.mxu0 0.0
    %708 = vmatpush1.msra.mxu0 0.0
    %709 = vmatprep.subr.mxu0 0.0
    %710 = vmatpush1.msra.mxu0 0.0
    %711 = vmatprep.subr.mxu0 0.0
    %712 = vmatpush1.msra.mxu0 0.0
    %713 = vmatprep.subr.mxu0 0.0
    %714 = vmatpush1.msra.mxu0 0.0
    %715 = vmatprep.subr.mxu0 0.0
    %716 = vmatpush1.msra.mxu0 0.0
    %717 = vmatprep.subr.mxu0 0.0
    %718 = vmatpush1.msra.mxu0 0.0
    %719 = vmatprep.subr.mxu0 0.0
    %720 = vmatpush1.msra.mxu0 0.0
    %721 = vmatprep.subr.mxu0 0.0
    %722 = vmatpush1.msra.mxu0 0.0
    %723 = vmatprep.subr.mxu0 0.0
    %724 = vmatpush1.msra.mxu0 0.0
    %725 = vmatprep.mubr.f32.mxu0 0.0
    %726 = vmatmul.mubr.f32.gmra.mrb[0].mxu0 %v656
    %v727 = vpop.f32.mrb[0].mxu0
    %v728 = vadd.f32 0.0, %v727
    %v729 = vpop.f32.mrb[0].mxu0
    %730 = vdwg.mxu0
    %v731 = vadd.f32 %v528, %v728
    %733 = vset.pattern.permute.xlu0 0
    %734 = vperm.xlu0 %733, %v51
    %v735 = vpop.permute.xlu0 %734
    %v737 = vadd.f32 %v731, %v735
    %v738 = vmul.f32 %v737, %v737
    %v740 = vrot.slane %v738, 1
    %v742 = vadd.f32 %v738, %v740
    %vm743 = vcmp.gt.f32.partialorder %v742, 1e-30
    %v744 = vsel %vm743, %v742, 1.0
    %v745 = vrsqrt.pop %v744
    %v746 = vmul.f32 %v737, %v745
    %v747 = vsel %vm743, %v746, 1.0
    %v749 = vrot.slane %v745, 7
    %v751 = vmul.f32 %v737, %v749
    %v753 = vrot.slane %v751, 1
    %v755 = vsel %vm743, %v753, 0.0
    %v756 = vmul.f32 %v755, 0.1
    %v758 = vrot.slane %v756, 6
    %v760 = vsub.f32 %v737, %v758
    %v761 = vmul.f32 %v760, 0.1
    %v762 = vand.u32 2147483647, %v761
    %vm763 = vcmp.le.f32.partialorder %v762, 0.7853982
    %vm764 = vcmp.lt.s32.totalorder %v761, 0
    %v765 = vand.u32 %v761, 2139095040
    %v766 = vshrl.u32 %v765, 23
    %v767 = vsub.s32 %v766, 127
    %v768 = vand.u32 2147483647, %v761
    %v769 = vand.u32 %v768, 8388607
    %v770 = vor.u32 %v769, 8388608
    %v771 = vsub.s32 0, %v770
    %v772 = vadd.s32 %v767, 1
    %vm773 = vcmp.gt.s32.totalorder %v772, 0
    %v774 = vsel %vm773, %v772, 0
    %v775 = vshrl.u32 %v774, 5
    %v776 = vand.u32 %v774, 31
    %v777 = vsub.s32 32, %v776
    %v778 = vshrl.u32 683565275, %v777
    %v779 = vshll.u32 683565275, %v776
    %v780 = vshrl.u32 2475754826, %v777
    %v781 = vor.u32 %v779, %v780
    %v782 = vshll.u32 2475754826, %v776
    %v783 = vshrl.u32 2131351028, %v777
    %v784 = vor.u32 %v782, %v783
    %v785 = vshll.u32 2131351028, %v776
    %v786 = vshrl.u32 2102212464, %v777
    %v787 = vor.u32 %v785, %v786
    %v788 = vshll.u32 2102212464, %v776
    %v789 = vshrl.u32 920167782, %v777
    %v790 = vor.u32 %v788, %v789
    %v791 = vshll.u32 920167782, %v776
    %v792 = vshrl.u32 1326507024, %v777
    %v793 = vor.u32 %v791, %v792
    %vm794 = vcmp.lt.s32.totalorder %v775, 1
    %vm795 = vcmp.lt.s32.totalorder %v775, 2
    %vm796 = vcmp.lt.s32.totalorder %v775, 3
    %vm797 = vcmp.lt.s32.totalorder %v775, 4
    %v798 = vsel %vm794, %v778, %v781
    %v799 = vsel %vm797, %v787, 2102212464
    %v800 = vsel %vm796, %v784, %v799
    %v801 = vsel %vm795, %v798, %v800
    %v802 = vsel %vm794, %v781, %v784
    %v803 = vsel %vm797, %v790, 920167782
    %v804 = vsel %vm796, %v787, %v803
    %v805 = vsel %vm795, %v802, %v804
    %v806 = vsel %vm794, %v784, %v787
    %v807 = vsel %vm797, %v793, 1326507024
    %v808 = vsel %vm796, %v790, %v807
    %v809 = vsel %vm795, %v806, %v808
    %v810 = vshll.u32 %v770, 8
    %v811 = vmul.u32.u64.compose %v810, %v809
    %v812 = vextract.low.u32 %v811
    %v813 = vextract.high.u32 %v811
    %v814 = vmul.u32.u64.compose %v810, %v805
    %v815 = vextract.low.u32 %v814
    %v816 = vextract.high.u32 %v814
    %v817 = vmul.u32 %v810, %v801
    %v818 = vadd.s32 %v813, %v815
    %vm819 = vc.u32 %v813, %v815
    %v820 = vadd.s32 %v816, 1
    %v821 = vsel %vm819, %v820, %v816
    %v822 = vadd.s32 %v817, %v821
    %v823 = vadd.s32 %v822, 536870912
    %v824 = vshrl.u32 %v823, 30
    %v825 = vshll.u32 %v824, 30
    %v826 = vsub.s32 %v822, %v825
    %vm827 = vcmp.lt.s32.totalorder %v826, 0
    %v828 = vsub.s32 0, %v826
    %v829 = vsel %vm827, %v828, %v826
    %v830 = vclz %v829
    %v831 = vsub.s32 %v830, 2
    %vm832 = vcmp.gt.s32.totalorder 0, %v831
    %v833 = vsel %vm832, 0, %v831
    %v834 = vsub.s32 32, %v833
    %v835 = vshll.u32 %v826, %v833
    %v836 = vshrl.u32 %v818, %v834
    %v837 = vor.u32 %v835, %v836
    %v838 = vsub.s32 4294967266, %v833
    %v839 = vadd.s32 %v838, 127
    %v840 = vshll.u32 %v839, 23
    %v841 = vor.u32 4788187, %v840
    %v842 = vand.u32 2147483647, %v841
    %v844 = vcvt.s32.f32 %v837
    %v845 = vmul.f32 %v844, %v842
    %v846 = vxor.u32 %v845, 2147483648
    %v847 = vsel %vm764, %v846, %v845
    %v848 = vsub.s32 4, %v824
    %v849 = vsel %vm764, %v848, %v824
    %v850 = vsel %vm763, %v761, %v847
    %v851 = vsel %vm763, 0, %v849
    %v852 = vcosq.f32.pop %v850
    %v853 = vsinq.f32.pop %v850
    %vm854 = vweird.f32 %v761
    %v855 = vand.u32 %v851, 3
    %vm856 = vcmp.lt.s32.totalorder %v855, 2
    %vm857 = vcmp.eq.s32.totalorder %v855, 0
    %v858 = vxor.u32 %v853, 2147483648
    %v859 = vsel %vm857, %v852, %v858
    %vm860 = vcmp.eq.s32.totalorder %v855, 2
    %v861 = vxor.u32 %v852, 2147483648
    %v862 = vsel %vm860, %v861, %v853
    %v863 = vsel %vm856, %v859, %v862
    %v864 = vsel %vm854, nan, %v863
    %v865 = vand.u32 2147483647, %v761
    %vm866 = vcmp.le.f32.partialorder %v865, 0.7853982
    %vm867 = vcmp.lt.s32.totalorder %v761, 0
    %v868 = vand.u32 %v761, 2139095040
    %v869 = vshrl.u32 %v868, 23
    %v870 = vsub.s32 %v869, 127
    %v871 = vand.u32 2147483647, %v761
    %v872 = vand.u32 %v871, 8388607
    %v873 = vor.u32 %v872, 8388608
    %v874 = vsub.s32 0, %v873
    %v875 = vadd.s32 %v870, 1
    %vm876 = vcmp.gt.s32.totalorder %v875, 0
    %v877 = vsel %vm876, %v875, 0
    %v878 = vshrl.u32 %v877, 5
    %v879 = vand.u32 %v877, 31
    %v880 = vsub.s32 32, %v879
    %v881 = vshrl.u32 683565275, %v880
    %v882 = vshll.u32 683565275, %v879
    %v883 = vshrl.u32 2475754826, %v880
    %v884 = vor.u32 %v882, %v883
    %v885 = vshll.u32 2475754826, %v879
    %v886 = vshrl.u32 2131351028, %v880
    %v887 = vor.u32 %v885, %v886
    %v888 = vshll.u32 2131351028, %v879
    %v889 = vshrl.u32 2102212464, %v880
    %v890 = vor.u32 %v888, %v889
    %v891 = vshll.u32 2102212464, %v879
    %v892 = vshrl.u32 920167782, %v880
    %v893 = vor.u32 %v891, %v892
    %v894 = vshll.u32 920167782, %v879
    %v895 = vshrl.u32 1326507024, %v880
    %v896 = vor.u32 %v894, %v895
    %vm897 = vcmp.lt.s32.totalorder %v878, 1
    %vm898 = vcmp.lt.s32.totalorder %v878, 2
    %vm899 = vcmp.lt.s32.totalorder %v878, 3
    %vm900 = vcmp.lt.s32.totalorder %v878, 4
    %v901 = vsel %vm897, %v881, %v884
    %v902 = vsel %vm900, %v890, 2102212464
    %v903 = vsel %vm899, %v887, %v902
    %v904 = vsel %vm898, %v901, %v903
    %v905 = vsel %vm897, %v884, %v887
    %v906 = vsel %vm900, %v893, 920167782
    %v907 = vsel %vm899, %v890, %v906
    %v908 = vsel %vm898, %v905, %v907
    %v909 = vsel %vm897, %v887, %v890
    %v910 = vsel %vm900, %v896, 1326507024
    %v911 = vsel %vm899, %v893, %v910
    %v912 = vsel %vm898, %v909, %v911
    %v913 = vshll.u32 %v873, 8
    %v914 = vmul.u32.u64.compose %v913, %v912
    %v915 = vextract.low.u32 %v914
    %v916 = vextract.high.u32 %v914
    %v917 = vmul.u32.u64.compose %v913, %v908
    %v918 = vextract.low.u32 %v917
    %v919 = vextract.high.u32 %v917
    %v920 = vmul.u32 %v913, %v904
    %v921 = vadd.s32 %v916, %v918
    %vm922 = vc.u32 %v916, %v918
    %v923 = vadd.s32 %v919, 1
    %v924 = vsel %vm922, %v923, %v919
    %v925 = vadd.s32 %v920, %v924
    %v926 = vadd.s32 %v925, 536870912
    %v927 = vshrl.u32 %v926, 30
    %v928 = vshll.u32 %v927, 30
    %v929 = vsub.s32 %v925, %v928
    %vm930 = vcmp.lt.s32.totalorder %v929, 0
    %v931 = vsub.s32 0, %v929
    %v932 = vsel %vm930, %v931, %v929
    %v933 = vclz %v932
    %v934 = vsub.s32 %v933, 2
    %vm935 = vcmp.gt.s32.totalorder 0, %v934
    %v936 = vsel %vm935, 0, %v934
    %v937 = vsub.s32 32, %v936
    %v938 = vshll.u32 %v929, %v936
    %v939 = vshrl.u32 %v921, %v937
    %v940 = vor.u32 %v938, %v939
    %v941 = vsub.s32 4294967266, %v936
    %v942 = vadd.s32 %v941, 127
    %v943 = vshll.u32 %v942, 23
    %v944 = vor.u32 4788187, %v943
    %v945 = vand.u32 2147483647, %v944
    %v947 = vcvt.s32.f32 %v940
    %v948 = vmul.f32 %v947, %v945
    %v949 = vxor.u32 %v948, 2147483648
    %v950 = vsel %vm867, %v949, %v948
    %v951 = vsub.s32 4, %v927
    %v952 = vsel %vm867, %v951, %v927
    %v953 = vsel %vm866, %v761, %v950
    %v954 = vsel %vm866, 0, %v952
    %v955 = vcosq.f32.pop %v953
    %v956 = vsinq.f32.pop %v953
    %vm957 = vweird.f32 %v761
    %v958 = vadd.s32 %v954, 3
    %v959 = vand.u32 %v958, 3
    %vm960 = vcmp.lt.s32.totalorder %v959, 2
    %vm961 = vcmp.eq.s32.totalorder %v959, 0
    %v962 = vxor.u32 %v956, 2147483648
    %v963 = vsel %vm961, %v955, %v962
    %vm964 = vcmp.eq.s32.totalorder %v959, 2
    %v965 = vxor.u32 %v955, 2147483648
    %v966 = vsel %vm964, %v965, %v956
    %v967 = vsel %vm960, %v963, %v966
    %v968 = vsel %vm957, nan, %v967
    %v970 = vrot.slane %v864, 2
    %v972 = vmul.f32 %v747, %v970
    %v974 = vrot.slane %v968, 2
    %v976 = vmul.f32 %v755, %v974
    %v977 = vsub.f32 %v972, %v976
    %v978 = vmul.f32 %v755, %v970
    %v979 = vmul.f32 %v747, %v974
    %v980 = vadd.f32 %v978, %v979
    %v982 = vrot.slane %v980, 7
    %v984 = vsel %vm525, %v977, %v982
    %v985 = vsel %vm527, %v984, %v760
    %v987 = vsel %vm562, %v985, 0
    %989 = vmatprep.subr.mxu0 0.0
    %990 = vmatpush1.msra.mxu0 %v987
    %991 = vmatprep.subr.mxu0 0.0
    %992 = vmatpush1.msra.mxu0 0.0
    %993 = vmatprep.subr.mxu0 0.0
    %994 = vmatpush1.msra.mxu0 0.0
    %995 = vmatprep.subr.mxu0 0.0
    %996 = vmatpush1.msra.mxu0 0.0
    %997 = vmatprep.subr.mxu0 0.0
    %998 = vmatpush1.msra.mxu0 0.0
    %999 = vmatprep.subr.mxu0 0.0
    %1000 = vmatpush1.msra.mxu0 0.0
    %1001 = vmatprep.subr.mxu0 0.0
    %1002 = vmatpush1.msra.mxu0 0.0
    %1003 = vmatprep.subr.mxu0 0.0
    %1004 = vmatpush1.msra.mxu0 0.0
    %1005 = vmatprep.subr.mxu0 0.0
    %1006 = vmatpush1.msra.mxu0 0.0
    %1007 = vmatprep.subr.mxu0 0.0
    %1008 = vmatpush1.msra.mxu0 0.0
    %1009 = vmatprep.subr.mxu0 0.0
    %1010 = vmatpush1.msra.mxu0 0.0
    %1011 = vmatprep.subr.mxu0 0.0
    %1012 = vmatpush1.msra.mxu0 0.0
    %1013 = vmatprep.subr.mxu0 0.0
    %1014 = vmatpush1.msra.mxu0 0.0
    %1015 = vmatprep.subr.mxu0 0.0
    %1016 = vmatpush1.msra.mxu0 0.0
    %1017 = vmatprep.subr.mxu0 0.0
    %1018 = vmatpush1.msra.mxu0 0.0
    %1019 = vmatprep.subr.mxu0 0.0
    %1020 = vmatpush1.msra.mxu0 0.0
    %1021 = vmatprep.subr.mxu0 0.0
    %1022 = vmatpush1.msra.mxu0 0.0
    %1023 = vmatprep.subr.mxu0 0.0
    %1024 = vmatpush1.msra.mxu0 0.0
    %1025 = vmatprep.subr.mxu0 0.0
    %1026 = vmatpush1.msra.mxu0 0.0
    %1027 = vmatprep.subr.mxu0 0.0
    %1028 = vmatpush1.msra.mxu0 0.0
    %1029 = vmatprep.subr.mxu0 0.0
    %1030 = vmatpush1.msra.mxu0 0.0
    %1031 = vmatprep.subr.mxu0 0.0
    %1032 = vmatpush1.msra.mxu0 0.0
    %1033 = vmatprep.subr.mxu0 0.0
    %1034 = vmatpush1.msra.mxu0 0.0
    %1035 = vmatprep.subr.mxu0 0.0
    %1036 = vmatpush1.msra.mxu0 0.0
    %1037 = vmatprep.subr.mxu0 0.0
    %1038 = vmatpush1.msra.mxu0 0.0
    %1039 = vmatprep.subr.mxu0 0.0
    %1040 = vmatpush1.msra.mxu0 0.0
    %1041 = vmatprep.subr.mxu0 0.0
    %1042 = vmatpush1.msra.mxu0 0.0
    %1043 = vmatprep.subr.mxu0 0.0
    %1044 = vmatpush1.msra.mxu0 0.0
    %1045 = vmatprep.subr.mxu0 0.0
    %1046 = vmatpush1.msra.mxu0 0.0
    %1047 = vmatprep.subr.mxu0 0.0
    %1048 = vmatpush1.msra.mxu0 0.0
    %1049 = vmatprep.subr.mxu0 0.0
    %1050 = vmatpush1.msra.mxu0 0.0
    %1051 = vmatprep.subr.mxu0 0.0
    %1052 = vmatpush1.msra.mxu0 0.0
    %1053 = vmatprep.mubr.f32.mxu0 0.0
    %1054 = vmatmul.mubr.f32.gmra.mrb[0].mxu0 %v551
    %v1055 = vpop.f32.mrb[0].mxu0
    %v1056 = vadd.f32 %v532, %v1055
    %v1057 = vpop.f32.mrb[0].mxu0
    %1058 = vmatprep.mubr.f32.mxu0 0.0
    %1059 = vmatmul.mubr.f32.gmra.mrb[0].mxu0 %v554
    %v1060 = vpop.f32.mrb[0].mxu0
    %v1061 = vadd.f32 %v537, %v1060
    %v1062 = vpop.f32.mrb[0].mxu0
    %1063 = vmatprep.mubr.f32.mxu0 0.0
    %1064 = vmatmul.mubr.f32.gmra.mrb[0].mxu0 %v557
    %v1065 = vpop.f32.mrb[0].mxu0
    %v1066 = vadd.f32 %v542, %v1065
    %v1067 = vpop.f32.mrb[0].mxu0
    %1068 = vmatprep.mubr.f32.mxu0 0.0
    %1069 = vmatmul.mubr.f32.gmra.mrb[0].mxu0 %v560
    %v1070 = vpop.f32.mrb[0].mxu0
    %v1071 = vadd.f32 %v547, %v1070
    %v1072 = vpop.f32.mrb[0].mxu0
    %1073 = vdwg.mxu0
    %v1074 = vmax.f32 %v1056, 0.0
    %v1075 = vmax.f32 %v1061, 0.0
    %v1076 = vmax.f32 %v1066, 0.0
    %v1077 = vmax.f32 %v1071, 0.0
    %v1079 = vsel %vm205, %v1077, 0
    %1081 = vmatprep.subr.mxu0 0.0
    %1082 = vmatpush1.msra.mxu0 %v1074
    %1083 = vmatprep.subr.mxu0 0.0
    %1084 = vmatpush1.msra.mxu0 %v1075
    %1085 = vmatprep.subr.mxu0 0.0
    %1086 = vmatpush1.msra.mxu0 %v1076
    %1087 = vmatprep.subr.mxu0 0.0
    %1088 = vmatpush1.msra.mxu0 %v1079
    %1089 = vmatprep.subr.mxu0 0.0
    %1090 = vmatpush1.msra.mxu0 0.0
    %1091 = vmatprep.subr.mxu0 0.0
    %1092 = vmatpush1.msra.mxu0 0.0
    %1093 = vmatprep.subr.mxu0 0.0
    %1094 = vmatpush1.msra.mxu0 0.0
    %1095 = vmatprep.subr.mxu0 0.0
    %1096 = vmatpush1.msra.mxu0 0.0
    %1097 = vmatprep.subr.mxu0 0.0
    %1098 = vmatpush1.msra.mxu0 0.0
    %1099 = vmatprep.subr.mxu0 0.0
    %1100 = vmatpush1.msra.mxu0 0.0
    %1101 = vmatprep.subr.mxu0 0.0
    %1102 = vmatpush1.msra.mxu0 0.0
    %1103 = vmatprep.subr.mxu0 0.0
    %1104 = vmatpush1.msra.mxu0 0.0
    %1105 = vmatprep.subr.mxu0 0.0
    %1106 = vmatpush1.msra.mxu0 0.0
    %1107 = vmatprep.subr.mxu0 0.0
    %1108 = vmatpush1.msra.mxu0 0.0
    %1109 = vmatprep.subr.mxu0 0.0
    %1110 = vmatpush1.msra.mxu0 0.0
    %1111 = vmatprep.subr.mxu0 0.0
    %1112 = vmatpush1.msra.mxu0 0.0
    %1113 = vmatprep.subr.mxu0 0.0
    %1114 = vmatpush1.msra.mxu0 0.0
    %1115 = vmatprep.subr.mxu0 0.0
    %1116 = vmatpush1.msra.mxu0 0.0
    %1117 = vmatprep.subr.mxu0 0.0
    %1118 = vmatpush1.msra.mxu0 0.0
    %1119 = vmatprep.subr.mxu0 0.0
    %1120 = vmatpush1.msra.mxu0 0.0
    %1121 = vmatprep.subr.mxu0 0.0
    %1122 = vmatpush1.msra.mxu0 0.0
    %1123 = vmatprep.subr.mxu0 0.0
    %1124 = vmatpush1.msra.mxu0 0.0
    %1125 = vmatprep.subr.mxu0 0.0
    %1126 = vmatpush1.msra.mxu0 0.0
    %1127 = vmatprep.subr.mxu0 0.0
    %1128 = vmatpush1.msra.mxu0 0.0
    %1129 = vmatprep.subr.mxu0 0.0
    %1130 = vmatpush1.msra.mxu0 0.0
    %1131 = vmatprep.subr.mxu0 0.0
    %1132 = vmatpush1.msra.mxu0 0.0
    %1133 = vmatprep.subr.mxu0 0.0
    %1134 = vmatpush1.msra.mxu0 0.0
    %1135 = vmatprep.subr.mxu0 0.0
    %1136 = vmatpush1.msra.mxu0 0.0
    %1137 = vmatprep.subr.mxu0 0.0
    %1138 = vmatpush1.msra.mxu0 0.0
    %1139 = vmatprep.subr.mxu0 0.0
    %1140 = vmatpush1.msra.mxu0 0.0
    %1141 = vmatprep.subr.mxu0 0.0
    %1142 = vmatpush1.msra.mxu0 0.0
    %1143 = vmatprep.subr.mxu0 0.0
    %1144 = vmatpush1.msra.mxu0 0.0
    %1145 = vmatprep.mubr.f32.mxu0 0.0
    %1146 = vmatmul.mubr.f32.gmra.mrb[0].mxu0 %v656
    %v1147 = vpop.f32.mrb[0].mxu0
    %v1148 = vadd.f32 0.0, %v1147
    %v1149 = vpop.f32.mrb[0].mxu0
    %1150 = vdwg.mxu0
    %v1151 = vadd.f32 %v985, %v1148
    %v1152 = vadd.f32 %v1151, %v735
    %1154 = vset.pattern.permute.xlu0 0
    %1155 = vperm.xlu0 %1154, %v58
    %v1156 = vpop.permute.xlu0 %1155
    %1159 = vset.pattern.permute.xlu0 0
    %1160 = vperm.xlu0 %1159, %v59
    %v1161 = vpop.permute.xlu0 %1160
    %1164 = vset.pattern.permute.xlu0 0
    %1165 = vperm.xlu0 %1164, %v60
    %v1166 = vpop.permute.xlu0 %1165
    %1169 = vset.pattern.permute.xlu0 0
    %1170 = vperm.xlu0 %1169, %v61
    %v1171 = vpop.permute.xlu0 %1170
    %v1174 = vsel %vm549, %v53, 0
    %v1177 = vsel %vm549, %v54, 0
    %v1180 = vsel %vm549, %v55, 0
    %v1183 = vsel %vm549, %v56, 0
    %v1186 = vsel %vm562, %v1152, 0
    %1188 = vmatprep.subr.mxu0 0.0
    %1189 = vmatpush1.msra.mxu0 %v1186
    %1190 = vmatprep.subr.mxu0 0.0
    %1191 = vmatpush1.msra.mxu0 0.0
    %1192 = vmatprep.subr.mxu0 0.0
    %1193 = vmatpush1.msra.mxu0 0.0
    %1194 = vmatprep.subr.mxu0 0.0
    %1195 = vmatpush1.msra.mxu0 0.0
    %1196 = vmatprep.subr.mxu0 0.0
    %1197 = vmatpush1.msra.mxu0 0.0
    %1198 = vmatprep.subr.mxu0 0.0
    %1199 = vmatpush1.msra.mxu0 0.0
    %1200 = vmatprep.subr.mxu0 0.0
    %1201 = vmatpush1.msra.mxu0 0.0
    %1202 = vmatprep.subr.mxu0 0.0
    %1203 = vmatpush1.msra.mxu0 0.0
    %1204 = vmatprep.subr.mxu0 0.0
    %1205 = vmatpush1.msra.mxu0 0.0
    %1206 = vmatprep.subr.mxu0 0.0
    %1207 = vmatpush1.msra.mxu0 0.0
    %1208 = vmatprep.subr.mxu0 0.0
    %1209 = vmatpush1.msra.mxu0 0.0
    %1210 = vmatprep.subr.mxu0 0.0
    %1211 = vmatpush1.msra.mxu0 0.0
    %1212 = vmatprep.subr.mxu0 0.0
    %1213 = vmatpush1.msra.mxu0 0.0
    %1214 = vmatprep.subr.mxu0 0.0
    %1215 = vmatpush1.msra.mxu0 0.0
    %1216 = vmatprep.subr.mxu0 0.0
    %1217 = vmatpush1.msra.mxu0 0.0
    %1218 = vmatprep.subr.mxu0 0.0
    %1219 = vmatpush1.msra.mxu0 0.0
    %1220 = vmatprep.subr.mxu0 0.0
    %1221 = vmatpush1.msra.mxu0 0.0
    %1222 = vmatprep.subr.mxu0 0.0
    %1223 = vmatpush1.msra.mxu0 0.0
    %1224 = vmatprep.subr.mxu0 0.0
    %1225 = vmatpush1.msra.mxu0 0.0
    %1226 = vmatprep.subr.mxu0 0.0
    %1227 = vmatpush1.msra.mxu0 0.0
    %1228 = vmatprep.subr.mxu0 0.0
    %1229 = vmatpush1.msra.mxu0 0.0
    %1230 = vmatprep.subr.mxu0 0.0
    %1231 = vmatpush1.msra.mxu0 0.0
    %1232 = vmatprep.subr.mxu0 0.0
    %1233 = vmatpush1.msra.mxu0 0.0
    %1234 = vmatprep.subr.mxu0 0.0
    %1235 = vmatpush1.msra.mxu0 0.0
    %1236 = vmatprep.subr.mxu0 0.0
    %1237 = vmatpush1.msra.mxu0 0.0
    %1238 = vmatprep.subr.mxu0 0.0
    %1239 = vmatpush1.msra.mxu0 0.0
    %1240 = vmatprep.subr.mxu0 0.0
    %1241 = vmatpush1.msra.mxu0 0.0
    %1242 = vmatprep.subr.mxu0 0.0
    %1243 = vmatpush1.msra.mxu0 0.0
    %1244 = vmatprep.subr.mxu0 0.0
    %1245 = vmatpush1.msra.mxu0 0.0
    %1246 = vmatprep.subr.mxu0 0.0
    %1247 = vmatpush1.msra.mxu0 0.0
    %1248 = vmatprep.subr.mxu0 0.0
    %1249 = vmatpush1.msra.mxu0 0.0
    %1250 = vmatprep.subr.mxu0 0.0
    %1251 = vmatpush1.msra.mxu0 0.0
    %1252 = vmatprep.mubr.f32.mxu0 0.0
    %1253 = vmatmul.mubr.f32.gmra.mrb[0].mxu0 %v1174
    %v1254 = vpop.f32.mrb[0].mxu0
    %v1255 = vadd.f32 %v1156, %v1254
    %v1256 = vpop.f32.mrb[0].mxu0
    %1257 = vmatprep.mubr.f32.mxu0 0.0
    %1258 = vmatmul.mubr.f32.gmra.mrb[0].mxu0 %v1177
    %v1259 = vpop.f32.mrb[0].mxu0
    %v1260 = vadd.f32 %v1161, %v1259
    %v1261 = vpop.f32.mrb[0].mxu0
    %1262 = vmatprep.mubr.f32.mxu0 0.0
    %1263 = vmatmul.mubr.f32.gmra.mrb[0].mxu0 %v1180
    %v1264 = vpop.f32.mrb[0].mxu0
    %v1265 = vadd.f32 %v1166, %v1264
    %v1266 = vpop.f32.mrb[0].mxu0
    %1267 = vmatprep.mubr.f32.mxu0 0.0
    %1268 = vmatmul.mubr.f32.gmra.mrb[0].mxu0 %v1183
    %v1269 = vpop.f32.mrb[0].mxu0
    %v1270 = vadd.f32 %v1171, %v1269
    %v1271 = vpop.f32.mrb[0].mxu0
    %1272 = vdwg.mxu0
    %v1273 = vmax.f32 %v1255, 0.0
    %v1274 = vmax.f32 %v1260, 0.0
    %v1275 = vmax.f32 %v1265, 0.0
    %v1276 = vmax.f32 %v1270, 0.0
    %1278 = vset.pattern.permute.xlu0 0
    %1279 = vperm.xlu0 %1278, %v66
    %v1280 = vpop.permute.xlu0 %1279
    %1283 = vset.pattern.permute.xlu0 0
    %1284 = vperm.xlu0 %1283, %v67
    %v1285 = vpop.permute.xlu0 %1284
    %v1288 = vsel %vm201, %v63, 0
    %v1291 = vsel %vm201, %v64, 0
    %v1294 = vsel %vm205, %v1276, 0
    %1296 = vmatprep.subr.mxu0 0.0
    %1297 = vmatpush1.msra.mxu0 %v1273
    %1298 = vmatprep.subr.mxu0 0.0
    %1299 = vmatpush1.msra.mxu0 %v1274
    %1300 = vmatprep.subr.mxu0 0.0
    %1301 = vmatpush1.msra.mxu0 %v1275
    %1302 = vmatprep.subr.mxu0 0.0
    %1303 = vmatpush1.msra.mxu0 %v1294
    %1304 = vmatprep.subr.mxu0 0.0
    %1305 = vmatpush1.msra.mxu0 0.0
    %1306 = vmatprep.subr.mxu0 0.0
    %1307 = vmatpush1.msra.mxu0 0.0
    %1308 = vmatprep.subr.mxu0 0.0
    %1309 = vmatpush1.msra.mxu0 0.0
    %1310 = vmatprep.subr.mxu0 0.0
    %1311 = vmatpush1.msra.mxu0 0.0
    %1312 = vmatprep.subr.mxu0 0.0
    %1313 = vmatpush1.msra.mxu0 0.0
    %1314 = vmatprep.subr.mxu0 0.0
    %1315 = vmatpush1.msra.mxu0 0.0
    %1316 = vmatprep.subr.mxu0 0.0
    %1317 = vmatpush1.msra.mxu0 0.0
    %1318 = vmatprep.subr.mxu0 0.0
    %1319 = vmatpush1.msra.mxu0 0.0
    %1320 = vmatprep.subr.mxu0 0.0
    %1321 = vmatpush1.msra.mxu0 0.0
    %1322 = vmatprep.subr.mxu0 0.0
    %1323 = vmatpush1.msra.mxu0 0.0
    %1324 = vmatprep.subr.mxu0 0.0
    %1325 = vmatpush1.msra.mxu0 0.0
    %1326 = vmatprep.subr.mxu0 0.0
    %1327 = vmatpush1.msra.mxu0 0.0
    %1328 = vmatprep.subr.mxu0 0.0
    %1329 = vmatpush1.msra.mxu0 0.0
    %1330 = vmatprep.subr.mxu0 0.0
    %1331 = vmatpush1.msra.mxu0 0.0
    %1332 = vmatprep.subr.mxu0 0.0
    %1333 = vmatpush1.msra.mxu0 0.0
    %1334 = vmatprep.subr.mxu0 0.0
    %1335 = vmatpush1.msra.mxu0 0.0
    %1336 = vmatprep.subr.mxu0 0.0
    %1337 = vmatpush1.msra.mxu0 0.0
    %1338 = vmatprep.subr.mxu0 0.0
    %1339 = vmatpush1.msra.mxu0 0.0
    %1340 = vmatprep.subr.mxu0 0.0
    %1341 = vmatpush1.msra.mxu0 0.0
    %1342 = vmatprep.subr.mxu0 0.0
    %1343 = vmatpush1.msra.mxu0 0.0
    %1344 = vmatprep.subr.mxu0 0.0
    %1345 = vmatpush1.msra.mxu0 0.0
    %1346 = vmatprep.subr.mxu0 0.0
    %1347 = vmatpush1.msra.mxu0 0.0
    %1348 = vmatprep.subr.mxu0 0.0
    %1349 = vmatpush1.msra.mxu0 0.0
    %1350 = vmatprep.subr.mxu0 0.0
    %1351 = vmatpush1.msra.mxu0 0.0
    %1352 = vmatprep.subr.mxu0 0.0
    %1353 = vmatpush1.msra.mxu0 0.0
    %1354 = vmatprep.subr.mxu0 0.0
    %1355 = vmatpush1.msra.mxu0 0.0
    %1356 = vmatprep.subr.mxu0 0.0
    %1357 = vmatpush1.msra.mxu0 0.0
    %1358 = vmatprep.subr.mxu0 0.0
    %1359 = vmatpush1.msra.mxu0 0.0
    %1360 = vmatprep.mubr.f32.mxu0 0.0
    %1361 = vmatmul.mubr.f32.gmra.mrb[0].mxu0 %v1288
    %v1362 = vpop.f32.mrb[0].mxu0
    %v1363 = vadd.f32 %v1280, %v1362
    %v1364 = vpop.f32.mrb[0].mxu0
    %1365 = vmatprep.mubr.f32.mxu0 0.0
    %1366 = vmatmul.mubr.f32.gmra.mrb[0].mxu0 %v1291
    %v1367 = vpop.f32.mrb[0].mxu0
    %v1368 = vadd.f32 %v1285, %v1367
    %v1369 = vpop.f32.mrb[0].mxu0
    %1370 = vdwg.mxu0
    %v1372 = vsel %vm103, %v1368, 0
    %1374 = vmatprep.subr.mxu0 0.0
    %1375 = vmatpush1.msra.mxu0 %v1363
    %1376 = vmatprep.subr.mxu0 0.0
    %1377 = vmatpush1.msra.mxu0 %v1372
    %1378 = vmatprep.subr.mxu0 0.0
    %1379 = vmatpush1.msra.mxu0 0.0
    %1380 = vmatprep.subr.mxu0 0.0
    %1381 = vmatpush1.msra.mxu0 0.0
    %1382 = vmatprep.subr.mxu0 0.0
    %1383 = vmatpush1.msra.mxu0 0.0
    %1384 = vmatprep.subr.mxu0 0.0
    %1385 = vmatpush1.msra.mxu0 0.0
    %1386 = vmatprep.subr.mxu0 0.0
    %1387 = vmatpush1.msra.mxu0 0.0
    %1388 = vmatprep.subr.mxu0 0.0
    %1389 = vmatpush1.msra.mxu0 0.0
    %1390 = vmatprep.subr.mxu0 0.0
    %1391 = vmatpush1.msra.mxu0 0.0
    %1392 = vmatprep.subr.mxu0 0.0
    %1393 = vmatpush1.msra.mxu0 0.0
    %1394 = vmatprep.subr.mxu0 0.0
    %1395 = vmatpush1.msra.mxu0 0.0
    %1396 = vmatprep.subr.mxu0 0.0
    %1397 = vmatpush1.msra.mxu0 0.0
    %1398 = vmatprep.subr.mxu0 0.0
    %1399 = vmatpush1.msra.mxu0 0.0
    %1400 = vmatprep.subr.mxu0 0.0
    %1401 = vmatpush1.msra.mxu0 0.0
    %1402 = vmatprep.subr.mxu0 0.0
    %1403 = vmatpush1.msra.mxu0 0.0
    %1404 = vmatprep.subr.mxu0 0.0
    %1405 = vmatpush1.msra.mxu0 0.0
    %1406 = vmatprep.subr.mxu0 0.0
    %1407 = vmatpush1.msra.mxu0 0.0
    %1408 = vmatprep.subr.mxu0 0.0
    %1409 = vmatpush1.msra.mxu0 0.0
    %1410 = vmatprep.subr.mxu0 0.0
    %1411 = vmatpush1.msra.mxu0 0.0
    %1412 = vmatprep.subr.mxu0 0.0
    %1413 = vmatpush1.msra.mxu0 0.0
    %1414 = vmatprep.subr.mxu0 0.0
    %1415 = vmatpush1.msra.mxu0 0.0
    %1416 = vmatprep.subr.mxu0 0.0
    %1417 = vmatpush1.msra.mxu0 0.0
    %1418 = vmatprep.subr.mxu0 0.0
    %1419 = vmatpush1.msra.mxu0 0.0
    %1420 = vmatprep.subr.mxu0 0.0
    %1421 = vmatpush1.msra.mxu0 0.0
    %1422 = vmatprep.subr.mxu0 0.0
    %1423 = vmatpush1.msra.mxu0 0.0
    %1424 = vmatprep.subr.mxu0 0.0
    %1425 = vmatpush1.msra.mxu0 0.0
    %1426 = vmatprep.subr.mxu0 0.0
    %1427 = vmatpush1.msra.mxu0 0.0
    %1428 = vmatprep.subr.mxu0 0.0
    %1429 = vmatpush1.msra.mxu0 0.0
    %1430 = vmatprep.subr.mxu0 0.0
    %1431 = vmatpush1.msra.mxu0 0.0
    %1432 = vmatprep.subr.mxu0 0.0
    %1433 = vmatpush1.msra.mxu0 0.0
    %1434 = vmatprep.subr.mxu0 0.0
    %1435 = vmatpush1.msra.mxu0 0.0
    %1436 = vmatprep.subr.mxu0 0.0
    %1437 = vmatpush1.msra.mxu0 0.0
    %1438 = vmatprep.mubr.f32.mxu0 0.0
    %1439 = vmatmul.mubr.f32.gmra.mrb[0].mxu0 %v92
    %v1440 = vpop.f32.mrb[0].mxu0
    %v1441 = vadd.f32 %v73, %v1440
    %v1442 = vpop.f32.mrb[0].mxu0
    %1443 = vmatprep.mubr.f32.mxu0 0.0
    %1444 = vmatmul.mubr.f32.gmra.mrb[0].mxu0 %v95
    %v1445 = vpop.f32.mrb[0].mxu0
    %v1446 = vadd.f32 %v78, %v1445
    %v1447 = vpop.f32.mrb[0].mxu0
    %1448 = vmatprep.mubr.f32.mxu0 0.0
    %1449 = vmatmul.mubr.f32.gmra.mrb[0].mxu0 %v98
    %v1450 = vpop.f32.mrb[0].mxu0
    %v1451 = vadd.f32 %v83, %v1450
    %v1452 = vpop.f32.mrb[0].mxu0
    %1453 = vmatprep.mubr.f32.mxu0 0.0
    %1454 = vmatmul.mubr.f32.gmra.mrb[0].mxu0 %v101
    %v1455 = vpop.f32.mrb[0].mxu0
    %v1456 = vadd.f32 %v88, %v1455
    %v1457 = vpop.f32.mrb[0].mxu0
    %1458 = vdwg.mxu0
    %v1459 = vmax.f32 %v1441, 0.0
    %v1460 = vmax.f32 %v1446, 0.0
    %v1461 = vmax.f32 %v1451, 0.0
    %v1462 = vmax.f32 %v1456, 0.0
    %v1464 = vsel %vm205, %v1462, 0
    %1466 = vmatprep.subr.mxu0 0.0
    %1467 = vmatpush1.msra.mxu0 %v1459
    %1468 = vmatprep.subr.mxu0 0.0
    %1469 = vmatpush1.msra.mxu0 %v1460
    %1470 = vmatprep.subr.mxu0 0.0
    %1471 = vmatpush1.msra.mxu0 %v1461
    %1472 = vmatprep.subr.mxu0 0.0
    %1473 = vmatpush1.msra.mxu0 %v1464
    %1474 = vmatprep.subr.mxu0 0.0
    %1475 = vmatpush1.msra.mxu0 0.0
    %1476 = vmatprep.subr.mxu0 0.0
    %1477 = vmatpush1.msra.mxu0 0.0
    %1478 = vmatprep.subr.mxu0 0.0
    %1479 = vmatpush1.msra.mxu0 0.0
    %1480 = vmatprep.subr.mxu0 0.0
    %1481 = vmatpush1.msra.mxu0 0.0
    %1482 = vmatprep.subr.mxu0 0.0
    %1483 = vmatpush1.msra.mxu0 0.0
    %1484 = vmatprep.subr.mxu0 0.0
    %1485 = vmatpush1.msra.mxu0 0.0
    %1486 = vmatprep.subr.mxu0 0.0
    %1487 = vmatpush1.msra.mxu0 0.0
    %1488 = vmatprep.subr.mxu0 0.0
    %1489 = vmatpush1.msra.mxu0 0.0
    %1490 = vmatprep.subr.mxu0 0.0
    %1491 = vmatpush1.msra.mxu0 0.0
    %1492 = vmatprep.subr.mxu0 0.0
    %1493 = vmatpush1.msra.mxu0 0.0
    %1494 = vmatprep.subr.mxu0 0.0
    %1495 = vmatpush1.msra.mxu0 0.0
    %1496 = vmatprep.subr.mxu0 0.0
    %1497 = vmatpush1.msra.mxu0 0.0
    %1498 = vmatprep.subr.mxu0 0.0
    %1499 = vmatpush1.msra.mxu0 0.0
    %1500 = vmatprep.subr.mxu0 0.0
    %1501 = vmatpush1.msra.mxu0 0.0
    %1502 = vmatprep.subr.mxu0 0.0
    %1503 = vmatpush1.msra.mxu0 0.0
    %1504 = vmatprep.subr.mxu0 0.0
    %1505 = vmatpush1.msra.mxu0 0.0
    %1506 = vmatprep.subr.mxu0 0.0
    %1507 = vmatpush1.msra.mxu0 0.0
    %1508 = vmatprep.subr.mxu0 0.0
    %1509 = vmatpush1.msra.mxu0 0.0
    %1510 = vmatprep.subr.mxu0 0.0
    %1511 = vmatpush1.msra.mxu0 0.0
    %1512 = vmatprep.subr.mxu0 0.0
    %1513 = vmatpush1.msra.mxu0 0.0
    %1514 = vmatprep.subr.mxu0 0.0
    %1515 = vmatpush1.msra.mxu0 0.0
    %1516 = vmatprep.subr.mxu0 0.0
    %1517 = vmatpush1.msra.mxu0 0.0
    %1518 = vmatprep.subr.mxu0 0.0
    %1519 = vmatpush1.msra.mxu0 0.0
    %1520 = vmatprep.subr.mxu0 0.0
    %1521 = vmatpush1.msra.mxu0 0.0
    %1522 = vmatprep.subr.mxu0 0.0
    %1523 = vmatpush1.msra.mxu0 0.0
    %1524 = vmatprep.subr.mxu0 0.0
    %1525 = vmatpush1.msra.mxu0 0.0
    %1526 = vmatprep.subr.mxu0 0.0
    %1527 = vmatpush1.msra.mxu0 0.0
    %1528 = vmatprep.subr.mxu0 0.0
    %1529 = vmatpush1.msra.mxu0 0.0
    %1530 = vmatprep.mubr.f32.mxu0 0.0
    %1531 = vmatmul.mubr.f32.gmra.mrb[0].mxu0 %v203
    %v1532 = vpop.f32.mrb[0].mxu0
    %v1533 = vadd.f32 %v199, %v1532
    %v1534 = vpop.f32.mrb[0].mxu0
    %1535 = vdwg.mxu0
    %v1536 = vmul.f32 %v1533, %v1533
    %v1538 = vrot.slane %v1536, 1
    %v1540 = vadd.f32 %v1536, %v1538
    %vm1541 = vcmp.gt.f32.partialorder %v1540, 1e-30
    %v1542 = vsel %vm1541, %v1540, 1.0
    %v1543 = vrsqrt.pop %v1542
    %v1544 = vmul.f32 %v1533, %v1543
    %v1545 = vsel %vm1541, %v1544, 1.0
    %v1547 = vrot.slane %v1543, 7
    %v1549 = vmul.f32 %v1533, %v1547
    %v1551 = vrot.slane %v1549, 1
    %v1553 = vsel %vm1541, %v1551, 0.0
    %v1554 = vmul.f32 %v1553, 0.1
    %v1556 = vrot.slane %v1554, 6
    %v1558 = vsub.f32 %v1533, %v1556
    %v1559 = vmul.f32 %v1558, 0.1
    %v1560 = vand.u32 2147483647, %v1559
    %vm1561 = vcmp.le.f32.partialorder %v1560, 0.7853982
    %vm1562 = vcmp.lt.s32.totalorder %v1559, 0
    %v1563 = vand.u32 %v1559, 2139095040
    %v1564 = vshrl.u32 %v1563, 23
    %v1565 = vsub.s32 %v1564, 127
    %v1566 = vand.u32 2147483647, %v1559
    %v1567 = vand.u32 %v1566, 8388607
    %v1568 = vor.u32 %v1567, 8388608
    %v1569 = vsub.s32 0, %v1568
    %v1570 = vadd.s32 %v1565, 1
    %vm1571 = vcmp.gt.s32.totalorder %v1570, 0
    %v1572 = vsel %vm1571, %v1570, 0
    %v1573 = vshrl.u32 %v1572, 5
    %v1574 = vand.u32 %v1572, 31
    %v1575 = vsub.s32 32, %v1574
    %v1576 = vshrl.u32 683565275, %v1575
    %v1577 = vshll.u32 683565275, %v1574
    %v1578 = vshrl.u32 2475754826, %v1575
    %v1579 = vor.u32 %v1577, %v1578
    %v1580 = vshll.u32 2475754826, %v1574
    %v1581 = vshrl.u32 2131351028, %v1575
    %v1582 = vor.u32 %v1580, %v1581
    %v1583 = vshll.u32 2131351028, %v1574
    %v1584 = vshrl.u32 2102212464, %v1575
    %v1585 = vor.u32 %v1583, %v1584
    %v1586 = vshll.u32 2102212464, %v1574
    %v1587 = vshrl.u32 920167782, %v1575
    %v1588 = vor.u32 %v1586, %v1587
    %v1589 = vshll.u32 920167782, %v1574
    %v1590 = vshrl.u32 1326507024, %v1575
    %v1591 = vor.u32 %v1589, %v1590
    %vm1592 = vcmp.lt.s32.totalorder %v1573, 1
    %vm1593 = vcmp.lt.s32.totalorder %v1573, 2
    %vm1594 = vcmp.lt.s32.totalorder %v1573, 3
    %vm1595 = vcmp.lt.s32.totalorder %v1573, 4
    %v1596 = vsel %vm1592, %v1576, %v1579
    %v1597 = vsel %vm1595, %v1585, 2102212464
    %v1598 = vsel %vm1594, %v1582, %v1597
    %v1599 = vsel %vm1593, %v1596, %v1598
    %v1600 = vsel %vm1592, %v1579, %v1582
    %v1601 = vsel %vm1595, %v1588, 920167782
    %v1602 = vsel %vm1594, %v1585, %v1601
    %v1603 = vsel %vm1593, %v1600, %v1602
    %v1604 = vsel %vm1592, %v1582, %v1585
    %v1605 = vsel %vm1595, %v1591, 1326507024
    %v1606 = vsel %vm1594, %v1588, %v1605
    %v1607 = vsel %vm1593, %v1604, %v1606
    %v1608 = vshll.u32 %v1568, 8
    %v1609 = vmul.u32.u64.compose %v1608, %v1607
    %v1610 = vextract.low.u32 %v1609
    %v1611 = vextract.high.u32 %v1609
    %v1612 = vmul.u32.u64.compose %v1608, %v1603
    %v1613 = vextract.low.u32 %v1612
    %v1614 = vextract.high.u32 %v1612
    %v1615 = vmul.u32 %v1608, %v1599
    %v1616 = vadd.s32 %v1611, %v1613
    %vm1617 = vc.u32 %v1611, %v1613
    %v1618 = vadd.s32 %v1614, 1
    %v1619 = vsel %vm1617, %v1618, %v1614
    %v1620 = vadd.s32 %v1615, %v1619
    %v1621 = vadd.s32 %v1620, 536870912
    %v1622 = vshrl.u32 %v1621, 30
    %v1623 = vshll.u32 %v1622, 30
    %v1624 = vsub.s32 %v1620, %v1623
    %vm1625 = vcmp.lt.s32.totalorder %v1624, 0
    %v1626 = vsub.s32 0, %v1624
    %v1627 = vsel %vm1625, %v1626, %v1624
    %v1628 = vclz %v1627
    %v1629 = vsub.s32 %v1628, 2
    %vm1630 = vcmp.gt.s32.totalorder 0, %v1629
    %v1631 = vsel %vm1630, 0, %v1629
    %v1632 = vsub.s32 32, %v1631
    %v1633 = vshll.u32 %v1624, %v1631
    %v1634 = vshrl.u32 %v1616, %v1632
    %v1635 = vor.u32 %v1633, %v1634
    %v1636 = vsub.s32 4294967266, %v1631
    %v1637 = vadd.s32 %v1636, 127
    %v1638 = vshll.u32 %v1637, 23
    %v1639 = vor.u32 4788187, %v1638
    %v1640 = vand.u32 2147483647, %v1639
    %v1642 = vcvt.s32.f32 %v1635
    %v1643 = vmul.f32 %v1642, %v1640
    %v1644 = vxor.u32 %v1643, 2147483648
    %v1645 = vsel %vm1562, %v1644, %v1643
    %v1646 = vsub.s32 4, %v1622
    %v1647 = vsel %vm1562, %v1646, %v1622
    %v1648 = vsel %vm1561, %v1559, %v1645
    %v1649 = vsel %vm1561, 0, %v1647
    %v1650 = vcosq.f32.pop %v1648
    %v1651 = vsinq.f32.pop %v1648
    %vm1652 = vweird.f32 %v1559
    %v1653 = vand.u32 %v1649, 3
    %vm1654 = vcmp.lt.s32.totalorder %v1653, 2
    %vm1655 = vcmp.eq.s32.totalorder %v1653, 0
    %v1656 = vxor.u32 %v1651, 2147483648
    %v1657 = vsel %vm1655, %v1650, %v1656
    %vm1658 = vcmp.eq.s32.totalorder %v1653, 2
    %v1659 = vxor.u32 %v1650, 2147483648
    %v1660 = vsel %vm1658, %v1659, %v1651
    %v1661 = vsel %vm1654, %v1657, %v1660
    %v1662 = vsel %vm1652, nan, %v1661
    %v1663 = vand.u32 2147483647, %v1559
    %vm1664 = vcmp.le.f32.partialorder %v1663, 0.7853982
    %vm1665 = vcmp.lt.s32.totalorder %v1559, 0
    %v1666 = vand.u32 %v1559, 2139095040
    %v1667 = vshrl.u32 %v1666, 23
    %v1668 = vsub.s32 %v1667, 127
    %v1669 = vand.u32 2147483647, %v1559
    %v1670 = vand.u32 %v1669, 8388607
    %v1671 = vor.u32 %v1670, 8388608
    %v1672 = vsub.s32 0, %v1671
    %v1673 = vadd.s32 %v1668, 1
    %vm1674 = vcmp.gt.s32.totalorder %v1673, 0
    %v1675 = vsel %vm1674, %v1673, 0
    %v1676 = vshrl.u32 %v1675, 5
    %v1677 = vand.u32 %v1675, 31
    %v1678 = vsub.s32 32, %v1677
    %v1679 = vshrl.u32 683565275, %v1678
    %v1680 = vshll.u32 683565275, %v1677
    %v1681 = vshrl.u32 2475754826, %v1678
    %v1682 = vor.u32 %v1680, %v1681
    %v1683 = vshll.u32 2475754826, %v1677
    %v1684 = vshrl.u32 2131351028, %v1678
    %v1685 = vor.u32 %v1683, %v1684
    %v1686 = vshll.u32 2131351028, %v1677
    %v1687 = vshrl.u32 2102212464, %v1678
    %v1688 = vor.u32 %v1686, %v1687
    %v1689 = vshll.u32 2102212464, %v1677
    %v1690 = vshrl.u32 920167782, %v1678
    %v1691 = vor.u32 %v1689, %v1690
    %v1692 = vshll.u32 920167782, %v1677
    %v1693 = vshrl.u32 1326507024, %v1678
    %v1694 = vor.u32 %v1692, %v1693
    %vm1695 = vcmp.lt.s32.totalorder %v1676, 1
    %vm1696 = vcmp.lt.s32.totalorder %v1676, 2
    %vm1697 = vcmp.lt.s32.totalorder %v1676, 3
    %vm1698 = vcmp.lt.s32.totalorder %v1676, 4
    %v1699 = vsel %vm1695, %v1679, %v1682
    %v1700 = vsel %vm1698, %v1688, 2102212464
    %v1701 = vsel %vm1697, %v1685, %v1700
    %v1702 = vsel %vm1696, %v1699, %v1701
    %v1703 = vsel %vm1695, %v1682, %v1685
    %v1704 = vsel %vm1698, %v1691, 920167782
    %v1705 = vsel %vm1697, %v1688, %v1704
    %v1706 = vsel %vm1696, %v1703, %v1705
    %v1707 = vsel %vm1695, %v1685, %v1688
    %v1708 = vsel %vm1698, %v1694, 1326507024
    %v1709 = vsel %vm1697, %v1691, %v1708
    %v1710 = vsel %vm1696, %v1707, %v1709
    %v1711 = vshll.u32 %v1671, 8
    %v1712 = vmul.u32.u64.compose %v1711, %v1710
    %v1713 = vextract.low.u32 %v1712
    %v1714 = vextract.high.u32 %v1712
    %v1715 = vmul.u32.u64.compose %v1711, %v1706
    %v1716 = vextract.low.u32 %v1715
    %v1717 = vextract.high.u32 %v1715
    %v1718 = vmul.u32 %v1711, %v1702
    %v1719 = vadd.s32 %v1714, %v1716
    %vm1720 = vc.u32 %v1714, %v1716
    %v1721 = vadd.s32 %v1717, 1
    %v1722 = vsel %vm1720, %v1721, %v1717
    %v1723 = vadd.s32 %v1718, %v1722
    %v1724 = vadd.s32 %v1723, 536870912
    %v1725 = vshrl.u32 %v1724, 30
    %v1726 = vshll.u32 %v1725, 30
    %v1727 = vsub.s32 %v1723, %v1726
    %vm1728 = vcmp.lt.s32.totalorder %v1727, 0
    %v1729 = vsub.s32 0, %v1727
    %v1730 = vsel %vm1728, %v1729, %v1727
    %v1731 = vclz %v1730
    %v1732 = vsub.s32 %v1731, 2
    %vm1733 = vcmp.gt.s32.totalorder 0, %v1732
    %v1734 = vsel %vm1733, 0, %v1732
    %v1735 = vsub.s32 32, %v1734
    %v1736 = vshll.u32 %v1727, %v1734
    %v1737 = vshrl.u32 %v1719, %v1735
    %v1738 = vor.u32 %v1736, %v1737
    %v1739 = vsub.s32 4294967266, %v1734
    %v1740 = vadd.s32 %v1739, 127
    %v1741 = vshll.u32 %v1740, 23
    %v1742 = vor.u32 4788187, %v1741
    %v1743 = vand.u32 2147483647, %v1742
    %v1745 = vcvt.s32.f32 %v1738
    %v1746 = vmul.f32 %v1745, %v1743
    %v1747 = vxor.u32 %v1746, 2147483648
    %v1748 = vsel %vm1665, %v1747, %v1746
    %v1749 = vsub.s32 4, %v1725
    %v1750 = vsel %vm1665, %v1749, %v1725
    %v1751 = vsel %vm1664, %v1559, %v1748
    %v1752 = vsel %vm1664, 0, %v1750
    %v1753 = vcosq.f32.pop %v1751
    %v1754 = vsinq.f32.pop %v1751
    %vm1755 = vweird.f32 %v1559
    %v1756 = vadd.s32 %v1752, 3
    %v1757 = vand.u32 %v1756, 3
    %vm1758 = vcmp.lt.s32.totalorder %v1757, 2
    %vm1759 = vcmp.eq.s32.totalorder %v1757, 0
    %v1760 = vxor.u32 %v1754, 2147483648
    %v1761 = vsel %vm1759, %v1753, %v1760
    %vm1762 = vcmp.eq.s32.totalorder %v1757, 2
    %v1763 = vxor.u32 %v1753, 2147483648
    %v1764 = vsel %vm1762, %v1763, %v1754
    %v1765 = vsel %vm1758, %v1761, %v1764
    %v1766 = vsel %vm1755, nan, %v1765
    %v1768 = vrot.slane %v1662, 2
    %v1770 = vmul.f32 %v1545, %v1768
    %v1772 = vrot.slane %v1766, 2
    %v1774 = vmul.f32 %v1553, %v1772
    %v1775 = vsub.f32 %v1770, %v1774
    %v1776 = vmul.f32 %v1553, %v1768
    %v1777 = vmul.f32 %v1545, %v1772
    %v1778 = vadd.f32 %v1776, %v1777
    %v1780 = vrot.slane %v1778, 7
    %v1782 = vsel %vm525, %v1775, %v1780
    %v1783 = vsel %vm527, %v1782, %v1558
    %v1785 = vsel %vm562, %v1783, 0
    %1787 = vmatprep.subr.mxu0 0.0
    %1788 = vmatpush1.msra.mxu0 %v1785
    %1789 = vmatprep.subr.mxu0 0.0
    %1790 = vmatpush1.msra.mxu0 0.0
    %1791 = vmatprep.subr.mxu0 0.0
    %1792 = vmatpush1.msra.mxu0 0.0
    %1793 = vmatprep.subr.mxu0 0.0
    %1794 = vmatpush1.msra.mxu0 0.0
    %1795 = vmatprep.subr.mxu0 0.0
    %1796 = vmatpush1.msra.mxu0 0.0
    %1797 = vmatprep.subr.mxu0 0.0
    %1798 = vmatpush1.msra.mxu0 0.0
    %1799 = vmatprep.subr.mxu0 0.0
    %1800 = vmatpush1.msra.mxu0 0.0
    %1801 = vmatprep.subr.mxu0 0.0
    %1802 = vmatpush1.msra.mxu0 0.0
    %1803 = vmatprep.subr.mxu0 0.0
    %1804 = vmatpush1.msra.mxu0 0.0
    %1805 = vmatprep.subr.mxu0 0.0
    %1806 = vmatpush1.msra.mxu0 0.0
    %1807 = vmatprep.subr.mxu0 0.0
    %1808 = vmatpush1.msra.mxu0 0.0
    %1809 = vmatprep.subr.mxu0 0.0
    %1810 = vmatpush1.msra.mxu0 0.0
    %1811 = vmatprep.subr.mxu0 0.0
    %1812 = vmatpush1.msra.mxu0 0.0
    %1813 = vmatprep.subr.mxu0 0.0
    %1814 = vmatpush1.msra.mxu0 0.0
    %1815 = vmatprep.subr.mxu0 0.0
    %1816 = vmatpush1.msra.mxu0 0.0
    %1817 = vmatprep.subr.mxu0 0.0
    %1818 = vmatpush1.msra.mxu0 0.0
    %1819 = vmatprep.subr.mxu0 0.0
    %1820 = vmatpush1.msra.mxu0 0.0
    %1821 = vmatprep.subr.mxu0 0.0
    %1822 = vmatpush1.msra.mxu0 0.0
    %1823 = vmatprep.subr.mxu0 0.0
    %1824 = vmatpush1.msra.mxu0 0.0
    %1825 = vmatprep.subr.mxu0 0.0
    %1826 = vmatpush1.msra.mxu0 0.0
    %1827 = vmatprep.subr.mxu0 0.0
    %1828 = vmatpush1.msra.mxu0 0.0
    %1829 = vmatprep.subr.mxu0 0.0
    %1830 = vmatpush1.msra.mxu0 0.0
    %1831 = vmatprep.subr.mxu0 0.0
    %1832 = vmatpush1.msra.mxu0 0.0
    %1833 = vmatprep.subr.mxu0 0.0
    %1834 = vmatpush1.msra.mxu0 0.0
    %1835 = vmatprep.subr.mxu0 0.0
    %1836 = vmatpush1.msra.mxu0 0.0
    %1837 = vmatprep.subr.mxu0 0.0
    %1838 = vmatpush1.msra.mxu0 0.0
    %1839 = vmatprep.subr.mxu0 0.0
    %1840 = vmatpush1.msra.mxu0 0.0
    %1841 = vmatprep.subr.mxu0 0.0
    %1842 = vmatpush1.msra.mxu0 0.0
    %1843 = vmatprep.subr.mxu0 0.0
    %1844 = vmatpush1.msra.mxu0 0.0
    %1845 = vmatprep.subr.mxu0 0.0
    %1846 = vmatpush1.msra.mxu0 0.0
    %1847 = vmatprep.subr.mxu0 0.0
    %1848 = vmatpush1.msra.mxu0 0.0
    %1849 = vmatprep.subr.mxu0 0.0
    %1850 = vmatpush1.msra.mxu0 0.0
    %1851 = vmatprep.mubr.f32.mxu0 0.0
    %1852 = vmatmul.mubr.f32.gmra.mrb[0].mxu0 %v551
    %v1853 = vpop.f32.mrb[0].mxu0
    %v1854 = vadd.f32 %v532, %v1853
    %v1855 = vpop.f32.mrb[0].mxu0
    %1856 = vmatprep.mubr.f32.mxu0 0.0
    %1857 = vmatmul.mubr.f32.gmra.mrb[0].mxu0 %v554
    %v1858 = vpop.f32.mrb[0].mxu0
    %v1859 = vadd.f32 %v537, %v1858
    %v1860 = vpop.f32.mrb[0].mxu0
    %1861 = vmatprep.mubr.f32.mxu0 0.0
    %1862 = vmatmul.mubr.f32.gmra.mrb[0].mxu0 %v557
    %v1863 = vpop.f32.mrb[0].mxu0
    %v1864 = vadd.f32 %v542, %v1863
    %v1865 = vpop.f32.mrb[0].mxu0
    %1866 = vmatprep.mubr.f32.mxu0 0.0
    %1867 = vmatmul.mubr.f32.gmra.mrb[0].mxu0 %v560
    %v1868 = vpop.f32.mrb[0].mxu0
    %v1869 = vadd.f32 %v547, %v1868
    %v1870 = vpop.f32.mrb[0].mxu0
    %1871 = vdwg.mxu0
    %v1872 = vmax.f32 %v1854, 0.0
    %v1873 = vmax.f32 %v1859, 0.0
    %v1874 = vmax.f32 %v1864, 0.0
    %v1875 = vmax.f32 %v1869, 0.0
    %v1877 = vsel %vm205, %v1875, 0
    %1879 = vmatprep.subr.mxu0 0.0
    %1880 = vmatpush1.msra.mxu0 %v1872
    %1881 = vmatprep.subr.mxu0 0.0
    %1882 = vmatpush1.msra.mxu0 %v1873
    %1883 = vmatprep.subr.mxu0 0.0
    %1884 = vmatpush1.msra.mxu0 %v1874
    %1885 = vmatprep.subr.mxu0 0.0
    %1886 = vmatpush1.msra.mxu0 %v1877
    %1887 = vmatprep.subr.mxu0 0.0
    %1888 = vmatpush1.msra.mxu0 0.0
    %1889 = vmatprep.subr.mxu0 0.0
    %1890 = vmatpush1.msra.mxu0 0.0
    %1891 = vmatprep.subr.mxu0 0.0
    %1892 = vmatpush1.msra.mxu0 0.0
    %1893 = vmatprep.subr.mxu0 0.0
    %1894 = vmatpush1.msra.mxu0 0.0
    %1895 = vmatprep.subr.mxu0 0.0
    %1896 = vmatpush1.msra.mxu0 0.0
    %1897 = vmatprep.subr.mxu0 0.0
    %1898 = vmatpush1.msra.mxu0 0.0
    %1899 = vmatprep.subr.mxu0 0.0
    %1900 = vmatpush1.msra.mxu0 0.0
    %1901 = vmatprep.subr.mxu0 0.0
    %1902 = vmatpush1.msra.mxu0 0.0
    %1903 = vmatprep.subr.mxu0 0.0
    %1904 = vmatpush1.msra.mxu0 0.0
    %1905 = vmatprep.subr.mxu0 0.0
    %1906 = vmatpush1.msra.mxu0 0.0
    %1907 = vmatprep.subr.mxu0 0.0
    %1908 = vmatpush1.msra.mxu0 0.0
    %1909 = vmatprep.subr.mxu0 0.0
    %1910 = vmatpush1.msra.mxu0 0.0
    %1911 = vmatprep.subr.mxu0 0.0
    %1912 = vmatpush1.msra.mxu0 0.0
    %1913 = vmatprep.subr.mxu0 0.0
    %1914 = vmatpush1.msra.mxu0 0.0
    %1915 = vmatprep.subr.mxu0 0.0
    %1916 = vmatpush1.msra.mxu0 0.0
    %1917 = vmatprep.subr.mxu0 0.0
    %1918 = vmatpush1.msra.mxu0 0.0
    %1919 = vmatprep.subr.mxu0 0.0
    %1920 = vmatpush1.msra.mxu0 0.0
    %1921 = vmatprep.subr.mxu0 0.0
    %1922 = vmatpush1.msra.mxu0 0.0
    %1923 = vmatprep.subr.mxu0 0.0
    %1924 = vmatpush1.msra.mxu0 0.0
    %1925 = vmatprep.subr.mxu0 0.0
    %1926 = vmatpush1.msra.mxu0 0.0
    %1927 = vmatprep.subr.mxu0 0.0
    %1928 = vmatpush1.msra.mxu0 0.0
    %1929 = vmatprep.subr.mxu0 0.0
    %1930 = vmatpush1.msra.mxu0 0.0
    %1931 = vmatprep.subr.mxu0 0.0
    %1932 = vmatpush1.msra.mxu0 0.0
    %1933 = vmatprep.subr.mxu0 0.0
    %1934 = vmatpush1.msra.mxu0 0.0
    %1935 = vmatprep.subr.mxu0 0.0
    %1936 = vmatpush1.msra.mxu0 0.0
    %1937 = vmatprep.subr.mxu0 0.0
    %1938 = vmatpush1.msra.mxu0 0.0
    %1939 = vmatprep.subr.mxu0 0.0
    %1940 = vmatpush1.msra.mxu0 0.0
    %1941 = vmatprep.subr.mxu0 0.0
    %1942 = vmatpush1.msra.mxu0 0.0
    %1943 = vmatprep.mubr.f32.mxu0 0.0
    %1944 = vmatmul.mubr.f32.gmra.mrb[0].mxu0 %v656
    %v1945 = vpop.f32.mrb[0].mxu0
    %v1946 = vadd.f32 0.0, %v1945
    %v1947 = vpop.f32.mrb[0].mxu0
    %1948 = vdwg.mxu0
    %v1949 = vadd.f32 %v1783, %v1946
    %v1950 = vadd.f32 %v1949, %v735
    %v1951 = vmul.f32 %v1950, %v1950
    %v1953 = vrot.slane %v1951, 1
    %v1955 = vadd.f32 %v1951, %v1953
    %vm1956 = vcmp.gt.f32.partialorder %v1955, 1e-30
    %v1957 = vsel %vm1956, %v1955, 1.0
    %v1958 = vrsqrt.pop %v1957
    %v1959 = vmul.f32 %v1950, %v1958
    %v1960 = vsel %vm1956, %v1959, 1.0
    %v1962 = vrot.slane %v1958, 7
    %v1964 = vmul.f32 %v1950, %v1962
    %v1966 = vrot.slane %v1964, 1
    %v1968 = vsel %vm1956, %v1966, 0.0
    %v1969 = vmul.f32 %v1968, 0.1
    %v1971 = vrot.slane %v1969, 6
    %v1973 = vsub.f32 %v1950, %v1971
    %v1974 = vmul.f32 %v1973, 0.1
    %v1975 = vand.u32 2147483647, %v1974
    %vm1976 = vcmp.le.f32.partialorder %v1975, 0.7853982
    %vm1977 = vcmp.lt.s32.totalorder %v1974, 0
    %v1978 = vand.u32 %v1974, 2139095040
    %v1979 = vshrl.u32 %v1978, 23
    %v1980 = vsub.s32 %v1979, 127
    %v1981 = vand.u32 2147483647, %v1974
    %v1982 = vand.u32 %v1981, 8388607
    %v1983 = vor.u32 %v1982, 8388608
    %v1984 = vsub.s32 0, %v1983
    %v1985 = vadd.s32 %v1980, 1
    %vm1986 = vcmp.gt.s32.totalorder %v1985, 0
    %v1987 = vsel %vm1986, %v1985, 0
    %v1988 = vshrl.u32 %v1987, 5
    %v1989 = vand.u32 %v1987, 31
    %v1990 = vsub.s32 32, %v1989
    %v1991 = vshrl.u32 683565275, %v1990
    %v1992 = vshll.u32 683565275, %v1989
    %v1993 = vshrl.u32 2475754826, %v1990
    %v1994 = vor.u32 %v1992, %v1993
    %v1995 = vshll.u32 2475754826, %v1989
    %v1996 = vshrl.u32 2131351028, %v1990
    %v1997 = vor.u32 %v1995, %v1996
    %v1998 = vshll.u32 2131351028, %v1989
    %v1999 = vshrl.u32 2102212464, %v1990
    %v2000 = vor.u32 %v1998, %v1999
    %v2001 = vshll.u32 2102212464, %v1989
    %v2002 = vshrl.u32 920167782, %v1990
    %v2003 = vor.u32 %v2001, %v2002
    %v2004 = vshll.u32 920167782, %v1989
    %v2005 = vshrl.u32 1326507024, %v1990
    %v2006 = vor.u32 %v2004, %v2005
    %vm2007 = vcmp.lt.s32.totalorder %v1988, 1
    %vm2008 = vcmp.lt.s32.totalorder %v1988, 2
    %vm2009 = vcmp.lt.s32.totalorder %v1988, 3
    %vm2010 = vcmp.lt.s32.totalorder %v1988, 4
    %v2011 = vsel %vm2007, %v1991, %v1994
    %v2012 = vsel %vm2010, %v2000, 2102212464
    %v2013 = vsel %vm2009, %v1997, %v2012
    %v2014 = vsel %vm2008, %v2011, %v2013
    %v2015 = vsel %vm2007, %v1994, %v1997
    %v2016 = vsel %vm2010, %v2003, 920167782
    %v2017 = vsel %vm2009, %v2000, %v2016
    %v2018 = vsel %vm2008, %v2015, %v2017
    %v2019 = vsel %vm2007, %v1997, %v2000
    %v2020 = vsel %vm2010, %v2006, 1326507024
    %v2021 = vsel %vm2009, %v2003, %v2020
    %v2022 = vsel %vm2008, %v2019, %v2021
    %v2023 = vshll.u32 %v1983, 8
    %v2024 = vmul.u32.u64.compose %v2023, %v2022
    %v2025 = vextract.low.u32 %v2024
    %v2026 = vextract.high.u32 %v2024
    %v2027 = vmul.u32.u64.compose %v2023, %v2018
    %v2028 = vextract.low.u32 %v2027
    %v2029 = vextract.high.u32 %v2027
    %v2030 = vmul.u32 %v2023, %v2014
    %v2031 = vadd.s32 %v2026, %v2028
    %vm2032 = vc.u32 %v2026, %v2028
    %v2033 = vadd.s32 %v2029, 1
    %v2034 = vsel %vm2032, %v2033, %v2029
    %v2035 = vadd.s32 %v2030, %v2034
    %v2036 = vadd.s32 %v2035, 536870912
    %v2037 = vshrl.u32 %v2036, 30
    %v2038 = vshll.u32 %v2037, 30
    %v2039 = vsub.s32 %v2035, %v2038
    %vm2040 = vcmp.lt.s32.totalorder %v2039, 0
    %v2041 = vsub.s32 0, %v2039
    %v2042 = vsel %vm2040, %v2041, %v2039
    %v2043 = vclz %v2042
    %v2044 = vsub.s32 %v2043, 2
    %vm2045 = vcmp.gt.s32.totalorder 0, %v2044
    %v2046 = vsel %vm2045, 0, %v2044
    %v2047 = vsub.s32 32, %v2046
    %v2048 = vshll.u32 %v2039, %v2046
    %v2049 = vshrl.u32 %v2031, %v2047
    %v2050 = vor.u32 %v2048, %v2049
    %v2051 = vsub.s32 4294967266, %v2046
    %v2052 = vadd.s32 %v2051, 127
    %v2053 = vshll.u32 %v2052, 23
    %v2054 = vor.u32 4788187, %v2053
    %v2055 = vand.u32 2147483647, %v2054
    %v2057 = vcvt.s32.f32 %v2050
    %v2058 = vmul.f32 %v2057, %v2055
    %v2059 = vxor.u32 %v2058, 2147483648
    %v2060 = vsel %vm1977, %v2059, %v2058
    %v2061 = vsub.s32 4, %v2037
    %v2062 = vsel %vm1977, %v2061, %v2037
    %v2063 = vsel %vm1976, %v1974, %v2060
    %v2064 = vsel %vm1976, 0, %v2062
    %v2065 = vcosq.f32.pop %v2063
    %v2066 = vsinq.f32.pop %v2063
    %vm2067 = vweird.f32 %v1974
    %v2068 = vand.u32 %v2064, 3
    %vm2069 = vcmp.lt.s32.totalorder %v2068, 2
    %vm2070 = vcmp.eq.s32.totalorder %v2068, 0
    %v2071 = vxor.u32 %v2066, 2147483648
    %v2072 = vsel %vm2070, %v2065, %v2071
    %vm2073 = vcmp.eq.s32.totalorder %v2068, 2
    %v2074 = vxor.u32 %v2065, 2147483648
    %v2075 = vsel %vm2073, %v2074, %v2066
    %v2076 = vsel %vm2069, %v2072, %v2075
    %v2077 = vsel %vm2067, nan, %v2076
    %v2078 = vand.u32 2147483647, %v1974
    %vm2079 = vcmp.le.f32.partialorder %v2078, 0.7853982
    %vm2080 = vcmp.lt.s32.totalorder %v1974, 0
    %v2081 = vand.u32 %v1974, 2139095040
    %v2082 = vshrl.u32 %v2081, 23
    %v2083 = vsub.s32 %v2082, 127
    %v2084 = vand.u32 2147483647, %v1974
    %v2085 = vand.u32 %v2084, 8388607
    %v2086 = vor.u32 %v2085, 8388608
    %v2087 = vsub.s32 0, %v2086
    %v2088 = vadd.s32 %v2083, 1
    %vm2089 = vcmp.gt.s32.totalorder %v2088, 0
    %v2090 = vsel %vm2089, %v2088, 0
    %v2091 = vshrl.u32 %v2090, 5
    %v2092 = vand.u32 %v2090, 31
    %v2093 = vsub.s32 32, %v2092
    %v2094 = vshrl.u32 683565275, %v2093
    %v2095 = vshll.u32 683565275, %v2092
    %v2096 = vshrl.u32 2475754826, %v2093
    %v2097 = vor.u32 %v2095, %v2096
    %v2098 = vshll.u32 2475754826, %v2092
    %v2099 = vshrl.u32 2131351028, %v2093
    %v2100 = vor.u32 %v2098, %v2099
    %v2101 = vshll.u32 2131351028, %v2092
    %v2102 = vshrl.u32 2102212464, %v2093
    %v2103 = vor.u32 %v2101, %v2102
    %v2104 = vshll.u32 2102212464, %v2092
    %v2105 = vshrl.u32 920167782, %v2093
    %v2106 = vor.u32 %v2104, %v2105
    %v2107 = vshll.u32 920167782, %v2092
    %v2108 = vshrl.u32 1326507024, %v2093
    %v2109 = vor.u32 %v2107, %v2108
    %vm2110 = vcmp.lt.s32.totalorder %v2091, 1
    %vm2111 = vcmp.lt.s32.totalorder %v2091, 2
    %vm2112 = vcmp.lt.s32.totalorder %v2091, 3
    %vm2113 = vcmp.lt.s32.totalorder %v2091, 4
    %v2114 = vsel %vm2110, %v2094, %v2097
    %v2115 = vsel %vm2113, %v2103, 2102212464
    %v2116 = vsel %vm2112, %v2100, %v2115
    %v2117 = vsel %vm2111, %v2114, %v2116
    %v2118 = vsel %vm2110, %v2097, %v2100
    %v2119 = vsel %vm2113, %v2106, 920167782
    %v2120 = vsel %vm2112, %v2103, %v2119
    %v2121 = vsel %vm2111, %v2118, %v2120
    %v2122 = vsel %vm2110, %v2100, %v2103
    %v2123 = vsel %vm2113, %v2109, 1326507024
    %v2124 = vsel %vm2112, %v2106, %v2123
    %v2125 = vsel %vm2111, %v2122, %v2124
    %v2126 = vshll.u32 %v2086, 8
    %v2127 = vmul.u32.u64.compose %v2126, %v2125
    %v2128 = vextract.low.u32 %v2127
    %v2129 = vextract.high.u32 %v2127
    %v2130 = vmul.u32.u64.compose %v2126, %v2121
    %v2131 = vextract.low.u32 %v2130
    %v2132 = vextract.high.u32 %v2130
    %v2133 = vmul.u32 %v2126, %v2117
    %v2134 = vadd.s32 %v2129, %v2131
    %vm2135 = vc.u32 %v2129, %v2131
    %v2136 = vadd.s32 %v2132, 1
    %v2137 = vsel %vm2135, %v2136, %v2132
    %v2138 = vadd.s32 %v2133, %v2137
    %v2139 = vadd.s32 %v2138, 536870912
    %v2140 = vshrl.u32 %v2139, 30
    %v2141 = vshll.u32 %v2140, 30
    %v2142 = vsub.s32 %v2138, %v2141
    %vm2143 = vcmp.lt.s32.totalorder %v2142, 0
    %v2144 = vsub.s32 0, %v2142
    %v2145 = vsel %vm2143, %v2144, %v2142
    %v2146 = vclz %v2145
    %v2147 = vsub.s32 %v2146, 2
    %vm2148 = vcmp.gt.s32.totalorder 0, %v2147
    %v2149 = vsel %vm2148, 0, %v2147
    %v2150 = vsub.s32 32, %v2149
    %v2151 = vshll.u32 %v2142, %v2149
    %v2152 = vshrl.u32 %v2134, %v2150
    %v2153 = vor.u32 %v2151, %v2152
    %v2154 = vsub.s32 4294967266, %v2149
    %v2155 = vadd.s32 %v2154, 127
    %v2156 = vshll.u32 %v2155, 23
    %v2157 = vor.u32 4788187, %v2156
    %v2158 = vand.u32 2147483647, %v2157
    %v2160 = vcvt.s32.f32 %v2153
    %v2161 = vmul.f32 %v2160, %v2158
    %v2162 = vxor.u32 %v2161, 2147483648
    %v2163 = vsel %vm2080, %v2162, %v2161
    %v2164 = vsub.s32 4, %v2140
    %v2165 = vsel %vm2080, %v2164, %v2140
    %v2166 = vsel %vm2079, %v1974, %v2163
    %v2167 = vsel %vm2079, 0, %v2165
    %v2168 = vcosq.f32.pop %v2166
    %v2169 = vsinq.f32.pop %v2166
    %vm2170 = vweird.f32 %v1974
    %v2171 = vadd.s32 %v2167, 3
    %v2172 = vand.u32 %v2171, 3
    %vm2173 = vcmp.lt.s32.totalorder %v2172, 2
    %vm2174 = vcmp.eq.s32.totalorder %v2172, 0
    %v2175 = vxor.u32 %v2169, 2147483648
    %v2176 = vsel %vm2174, %v2168, %v2175
    %vm2177 = vcmp.eq.s32.totalorder %v2172, 2
    %v2178 = vxor.u32 %v2168, 2147483648
    %v2179 = vsel %vm2177, %v2178, %v2169
    %v2180 = vsel %vm2173, %v2176, %v2179
    %v2181 = vsel %vm2170, nan, %v2180
    %v2183 = vrot.slane %v2077, 2
    %v2185 = vmul.f32 %v1960, %v2183
    %v2187 = vrot.slane %v2181, 2
    %v2189 = vmul.f32 %v1968, %v2187
    %v2190 = vsub.f32 %v2185, %v2189
    %v2191 = vmul.f32 %v1968, %v2183
    %v2192 = vmul.f32 %v1960, %v2187
    %v2193 = vadd.f32 %v2191, %v2192
    %v2195 = vrot.slane %v2193, 7
    %v2197 = vsel %vm525, %v2190, %v2195
    %v2198 = vsel %vm527, %v2197, %v1973
    %v2200 = vsel %vm562, %v2198, 0
    %2202 = vmatprep.subr.mxu0 0.0
    %2203 = vmatpush1.msra.mxu0 %v2200
    %2204 = vmatprep.subr.mxu0 0.0
    %2205 = vmatpush1.msra.mxu0 0.0
    %2206 = vmatprep.subr.mxu0 0.0
    %2207 = vmatpush1.msra.mxu0 0.0
    %2208 = vmatprep.subr.mxu0 0.0
    %2209 = vmatpush1.msra.mxu0 0.0
    %2210 = vmatprep.subr.mxu0 0.0
    %2211 = vmatpush1.msra.mxu0 0.0
    %2212 = vmatprep.subr.mxu0 0.0
    %2213 = vmatpush1.msra.mxu0 0.0
    %2214 = vmatprep.subr.mxu0 0.0
    %2215 = vmatpush1.msra.mxu0 0.0
    %2216 = vmatprep.subr.mxu0 0.0
    %2217 = vmatpush1.msra.mxu0 0.0
    %2218 = vmatprep.subr.mxu0 0.0
    %2219 = vmatpush1.msra.mxu0 0.0
    %2220 = vmatprep.subr.mxu0 0.0
    %2221 = vmatpush1.msra.mxu0 0.0
    %2222 = vmatprep.subr.mxu0 0.0
    %2223 = vmatpush1.msra.mxu0 0.0
    %2224 = vmatprep.subr.mxu0 0.0
    %2225 = vmatpush1.msra.mxu0 0.0
    %2226 = vmatprep.subr.mxu0 0.0
    %2227 = vmatpush1.msra.mxu0 0.0
    %2228 = vmatprep.subr.mxu0 0.0
    %2229 = vmatpush1.msra.mxu0 0.0
    %2230 = vmatprep.subr.mxu0 0.0
    %2231 = vmatpush1.msra.mxu0 0.0
    %2232 = vmatprep.subr.mxu0 0.0
    %2233 = vmatpush1.msra.mxu0 0.0
    %2234 = vmatprep.subr.mxu0 0.0
    %2235 = vmatpush1.msra.mxu0 0.0
    %2236 = vmatprep.subr.mxu0 0.0
    %2237 = vmatpush1.msra.mxu0 0.0
    %2238 = vmatprep.subr.mxu0 0.0
    %2239 = vmatpush1.msra.mxu0 0.0
    %2240 = vmatprep.subr.mxu0 0.0
    %2241 = vmatpush1.msra.mxu0 0.0
    %2242 = vmatprep.subr.mxu0 0.0
    %2243 = vmatpush1.msra.mxu0 0.0
    %2244 = vmatprep.subr.mxu0 0.0
    %2245 = vmatpush1.msra.mxu0 0.0
    %2246 = vmatprep.subr.mxu0 0.0
    %2247 = vmatpush1.msra.mxu0 0.0
    %2248 = vmatprep.subr.mxu0 0.0
    %2249 = vmatpush1.msra.mxu0 0.0
    %2250 = vmatprep.subr.mxu0 0.0
    %2251 = vmatpush1.msra.mxu0 0.0
    %2252 = vmatprep.subr.mxu0 0.0
    %2253 = vmatpush1.msra.mxu0 0.0
    %2254 = vmatprep.subr.mxu0 0.0
    %2255 = vmatpush1.msra.mxu0 0.0
    %2256 = vmatprep.subr.mxu0 0.0
    %2257 = vmatpush1.msra.mxu0 0.0
    %2258 = vmatprep.subr.mxu0 0.0
    %2259 = vmatpush1.msra.mxu0 0.0
    %2260 = vmatprep.subr.mxu0 0.0
    %2261 = vmatpush1.msra.mxu0 0.0
    %2262 = vmatprep.subr.mxu0 0.0
    %2263 = vmatpush1.msra.mxu0 0.0
    %2264 = vmatprep.subr.mxu0 0.0
    %2265 = vmatpush1.msra.mxu0 0.0
    %2266 = vmatprep.mubr.f32.mxu0 0.0
    %2267 = vmatmul.mubr.f32.gmra.mrb[0].mxu0 %v551
    %v2268 = vpop.f32.mrb[0].mxu0
    %v2269 = vadd.f32 %v532, %v2268
    %v2270 = vpop.f32.mrb[0].mxu0
    %2271 = vmatprep.mubr.f32.mxu0 0.0
    %2272 = vmatmul.mubr.f32.gmra.mrb[0].mxu0 %v554
    %v2273 = vpop.f32.mrb[0].mxu0
    %v2274 = vadd.f32 %v537, %v2273
    %v2275 = vpop.f32.mrb[0].mxu0
    %2276 = vmatprep.mubr.f32.mxu0 0.0
    %2277 = vmatmul.mubr.f32.gmra.mrb[0].mxu0 %v557
    %v2278 = vpop.f32.mrb[0].mxu0
    %v2279 = vadd.f32 %v542, %v2278
    %v2280 = vpop.f32.mrb[0].mxu0
    %2281 = vmatprep.mubr.f32.mxu0 0.0
    %2282 = vmatmul.mubr.f32.gmra.mrb[0].mxu0 %v560
    %v2283 = vpop.f32.mrb[0].mxu0
    %v2284 = vadd.f32 %v547, %v2283
    %v2285 = vpop.f32.mrb[0].mxu0
    %2286 = vdwg.mxu0
    %v2287 = vmax.f32 %v2269, 0.0
    %v2288 = vmax.f32 %v2274, 0.0
    %v2289 = vmax.f32 %v2279, 0.0
    %v2290 = vmax.f32 %v2284, 0.0
    %v2292 = vsel %vm205, %v2290, 0
    %2294 = vmatprep.subr.mxu0 0.0
    %2295 = vmatpush1.msra.mxu0 %v2287
    %2296 = vmatprep.subr.mxu0 0.0
    %2297 = vmatpush1.msra.mxu0 %v2288
    %2298 = vmatprep.subr.mxu0 0.0
    %2299 = vmatpush1.msra.mxu0 %v2289
    %2300 = vmatprep.subr.mxu0 0.0
    %2301 = vmatpush1.msra.mxu0 %v2292
    %2302 = vmatprep.subr.mxu0 0.0
    %2303 = vmatpush1.msra.mxu0 0.0
    %2304 = vmatprep.subr.mxu0 0.0
    %2305 = vmatpush1.msra.mxu0 0.0
    %2306 = vmatprep.subr.mxu0 0.0
    %2307 = vmatpush1.msra.mxu0 0.0
    %2308 = vmatprep.subr.mxu0 0.0
    %2309 = vmatpush1.msra.mxu0 0.0
    %2310 = vmatprep.subr.mxu0 0.0
    %2311 = vmatpush1.msra.mxu0 0.0
    %2312 = vmatprep.subr.mxu0 0.0
    %2313 = vmatpush1.msra.mxu0 0.0
    %2314 = vmatprep.subr.mxu0 0.0
    %2315 = vmatpush1.msra.mxu0 0.0
    %2316 = vmatprep.subr.mxu0 0.0
    %2317 = vmatpush1.msra.mxu0 0.0
    %2318 = vmatprep.subr.mxu0 0.0
    %2319 = vmatpush1.msra.mxu0 0.0
    %2320 = vmatprep.subr.mxu0 0.0
    %2321 = vmatpush1.msra.mxu0 0.0
    %2322 = vmatprep.subr.mxu0 0.0
    %2323 = vmatpush1.msra.mxu0 0.0
    %2324 = vmatprep.subr.mxu0 0.0
    %2325 = vmatpush1.msra.mxu0 0.0
    %2326 = vmatprep.subr.mxu0 0.0
    %2327 = vmatpush1.msra.mxu0 0.0
    %2328 = vmatprep.subr.mxu0 0.0
    %2329 = vmatpush1.msra.mxu0 0.0
    %2330 = vmatprep.subr.mxu0 0.0
    %2331 = vmatpush1.msra.mxu0 0.0
    %2332 = vmatprep.subr.mxu0 0.0
    %2333 = vmatpush1.msra.mxu0 0.0
    %2334 = vmatprep.subr.mxu0 0.0
    %2335 = vmatpush1.msra.mxu0 0.0
    %2336 = vmatprep.subr.mxu0 0.0
    %2337 = vmatpush1.msra.mxu0 0.0
    %2338 = vmatprep.subr.mxu0 0.0
    %2339 = vmatpush1.msra.mxu0 0.0
    %2340 = vmatprep.subr.mxu0 0.0
    %2341 = vmatpush1.msra.mxu0 0.0
    %2342 = vmatprep.subr.mxu0 0.0
    %2343 = vmatpush1.msra.mxu0 0.0
    %2344 = vmatprep.subr.mxu0 0.0
    %2345 = vmatpush1.msra.mxu0 0.0
    %2346 = vmatprep.subr.mxu0 0.0
    %2347 = vmatpush1.msra.mxu0 0.0
    %2348 = vmatprep.subr.mxu0 0.0
    %2349 = vmatpush1.msra.mxu0 0.0
    %2350 = vmatprep.subr.mxu0 0.0
    %2351 = vmatpush1.msra.mxu0 0.0
    %2352 = vmatprep.subr.mxu0 0.0
    %2353 = vmatpush1.msra.mxu0 0.0
    %2354 = vmatprep.subr.mxu0 0.0
    %2355 = vmatpush1.msra.mxu0 0.0
    %2356 = vmatprep.subr.mxu0 0.0
    %2357 = vmatpush1.msra.mxu0 0.0
    %2358 = vmatprep.mubr.f32.mxu0 0.0
    %2359 = vmatmul.mubr.f32.gmra.mrb[0].mxu0 %v656
    %v2360 = vpop.f32.mrb[0].mxu0
    %v2361 = vadd.f32 0.0, %v2360
    %v2362 = vpop.f32.mrb[0].mxu0
    %2363 = vdwg.mxu0
    %v2364 = vadd.f32 %v2198, %v2361
    %v2365 = vadd.f32 %v2364, %v735
    %v2367 = vsel %vm562, %v2365, 0
    %2369 = vmatprep.subr.mxu0 0.0
    %2370 = vmatpush1.msra.mxu0 %v2367
    %2371 = vmatprep.subr.mxu0 0.0
    %2372 = vmatpush1.msra.mxu0 0.0
    %2373 = vmatprep.subr.mxu0 0.0
    %2374 = vmatpush1.msra.mxu0 0.0
    %2375 = vmatprep.subr.mxu0 0.0
    %2376 = vmatpush1.msra.mxu0 0.0
    %2377 = vmatprep.subr.mxu0 0.0
    %2378 = vmatpush1.msra.mxu0 0.0
    %2379 = vmatprep.subr.mxu0 0.0
    %2380 = vmatpush1.msra.mxu0 0.0
    %2381 = vmatprep.subr.mxu0 0.0
    %2382 = vmatpush1.msra.mxu0 0.0
    %2383 = vmatprep.subr.mxu0 0.0
    %2384 = vmatpush1.msra.mxu0 0.0
    %2385 = vmatprep.subr.mxu0 0.0
    %2386 = vmatpush1.msra.mxu0 0.0
    %2387 = vmatprep.subr.mxu0 0.0
    %2388 = vmatpush1.msra.mxu0 0.0
    %2389 = vmatprep.subr.mxu0 0.0
    %2390 = vmatpush1.msra.mxu0 0.0
    %2391 = vmatprep.subr.mxu0 0.0
    %2392 = vmatpush1.msra.mxu0 0.0
    %2393 = vmatprep.subr.mxu0 0.0
    %2394 = vmatpush1.msra.mxu0 0.0
    %2395 = vmatprep.subr.mxu0 0.0
    %2396 = vmatpush1.msra.mxu0 0.0
    %2397 = vmatprep.subr.mxu0 0.0
    %2398 = vmatpush1.msra.mxu0 0.0
    %2399 = vmatprep.subr.mxu0 0.0
    %2400 = vmatpush1.msra.mxu0 0.0
    %2401 = vmatprep.subr.mxu0 0.0
    %2402 = vmatpush1.msra.mxu0 0.0
    %2403 = vmatprep.subr.mxu0 0.0
    %2404 = vmatpush1.msra.mxu0 0.0
    %2405 = vmatprep.subr.mxu0 0.0
    %2406 = vmatpush1.msra.mxu0 0.0
    %2407 = vmatprep.subr.mxu0 0.0
    %2408 = vmatpush1.msra.mxu0 0.0
    %2409 = vmatprep.subr.mxu0 0.0
    %2410 = vmatpush1.msra.mxu0 0.0
    %2411 = vmatprep.subr.mxu0 0.0
    %2412 = vmatpush1.msra.mxu0 0.0
    %2413 = vmatprep.subr.mxu0 0.0
    %2414 = vmatpush1.msra.mxu0 0.0
    %2415 = vmatprep.subr.mxu0 0.0
    %2416 = vmatpush1.msra.mxu0 0.0
    %2417 = vmatprep.subr.mxu0 0.0
    %2418 = vmatpush1.msra.mxu0 0.0
    %2419 = vmatprep.subr.mxu0 0.0
    %2420 = vmatpush1.msra.mxu0 0.0
    %2421 = vmatprep.subr.mxu0 0.0
    %2422 = vmatpush1.msra.mxu0 0.0
    %2423 = vmatprep.subr.mxu0 0.0
    %2424 = vmatpush1.msra.mxu0 0.0
    %2425 = vmatprep.subr.mxu0 0.0
    %2426 = vmatpush1.msra.mxu0 0.0
    %2427 = vmatprep.subr.mxu0 0.0
    %2428 = vmatpush1.msra.mxu0 0.0
    %2429 = vmatprep.subr.mxu0 0.0
    %2430 = vmatpush1.msra.mxu0 0.0
    %2431 = vmatprep.subr.mxu0 0.0
    %2432 = vmatpush1.msra.mxu0 0.0
    %2433 = vmatprep.mubr.f32.mxu0 0.0
    %2434 = vmatmul.mubr.f32.gmra.mrb[0].mxu0 %v1174
    %v2435 = vpop.f32.mrb[0].mxu0
    %v2436 = vadd.f32 %v1156, %v2435
    %v2437 = vpop.f32.mrb[0].mxu0
    %2438 = vmatprep.mubr.f32.mxu0 0.0
    %2439 = vmatmul.mubr.f32.gmra.mrb[0].mxu0 %v1177
    %v2440 = vpop.f32.mrb[0].mxu0
    %v2441 = vadd.f32 %v1161, %v2440
    %v2442 = vpop.f32.mrb[0].mxu0
    %2443 = vmatprep.mubr.f32.mxu0 0.0
    %2444 = vmatmul.mubr.f32.gmra.mrb[0].mxu0 %v1180
    %v2445 = vpop.f32.mrb[0].mxu0
    %v2446 = vadd.f32 %v1166, %v2445
    %v2447 = vpop.f32.mrb[0].mxu0
    %2448 = vmatprep.mubr.f32.mxu0 0.0
    %2449 = vmatmul.mubr.f32.gmra.mrb[0].mxu0 %v1183
    %v2450 = vpop.f32.mrb[0].mxu0
    %v2451 = vadd.f32 %v1171, %v2450
    %v2452 = vpop.f32.mrb[0].mxu0
    %2453 = vdwg.mxu0
    %v2454 = vmax.f32 %v2436, 0.0
    %v2455 = vmax.f32 %v2441, 0.0
    %v2456 = vmax.f32 %v2446, 0.0
    %v2457 = vmax.f32 %v2451, 0.0
    %v2459 = vsel %vm205, %v2457, 0
    %2461 = vmatprep.subr.mxu0 0.0
    %2462 = vmatpush1.msra.mxu0 %v2454
    %2463 = vmatprep.subr.mxu0 0.0
    %2464 = vmatpush1.msra.mxu0 %v2455
    %2465 = vmatprep.subr.mxu0 0.0
    %2466 = vmatpush1.msra.mxu0 %v2456
    %2467 = vmatprep.subr.mxu0 0.0
    %2468 = vmatpush1.msra.mxu0 %v2459
    %2469 = vmatprep.subr.mxu0 0.0
    %2470 = vmatpush1.msra.mxu0 0.0
    %2471 = vmatprep.subr.mxu0 0.0
    %2472 = vmatpush1.msra.mxu0 0.0
    %2473 = vmatprep.subr.mxu0 0.0
    %2474 = vmatpush1.msra.mxu0 0.0
    %2475 = vmatprep.subr.mxu0 0.0
    %2476 = vmatpush1.msra.mxu0 0.0
    %2477 = vmatprep.subr.mxu0 0.0
    %2478 = vmatpush1.msra.mxu0 0.0
    %2479 = vmatprep.subr.mxu0 0.0
    %2480 = vmatpush1.msra.mxu0 0.0
    %2481 = vmatprep.subr.mxu0 0.0
    %2482 = vmatpush1.msra.mxu0 0.0
    %2483 = vmatprep.subr.mxu0 0.0
    %2484 = vmatpush1.msra.mxu0 0.0
    %2485 = vmatprep.subr.mxu0 0.0
    %2486 = vmatpush1.msra.mxu0 0.0
    %2487 = vmatprep.subr.mxu0 0.0
    %2488 = vmatpush1.msra.mxu0 0.0
    %2489 = vmatprep.subr.mxu0 0.0
    %2490 = vmatpush1.msra.mxu0 0.0
    %2491 = vmatprep.subr.mxu0 0.0
    %2492 = vmatpush1.msra.mxu0 0.0
    %2493 = vmatprep.subr.mxu0 0.0
    %2494 = vmatpush1.msra.mxu0 0.0
    %2495 = vmatprep.subr.mxu0 0.0
    %2496 = vmatpush1.msra.mxu0 0.0
    %2497 = vmatprep.subr.mxu0 0.0
    %2498 = vmatpush1.msra.mxu0 0.0
    %2499 = vmatprep.subr.mxu0 0.0
    %2500 = vmatpush1.msra.mxu0 0.0
    %2501 = vmatprep.subr.mxu0 0.0
    %2502 = vmatpush1.msra.mxu0 0.0
    %2503 = vmatprep.subr.mxu0 0.0
    %2504 = vmatpush1.msra.mxu0 0.0
    %2505 = vmatprep.subr.mxu0 0.0
    %2506 = vmatpush1.msra.mxu0 0.0
    %2507 = vmatprep.subr.mxu0 0.0
    %2508 = vmatpush1.msra.mxu0 0.0
    %2509 = vmatprep.subr.mxu0 0.0
    %2510 = vmatpush1.msra.mxu0 0.0
    %2511 = vmatprep.subr.mxu0 0.0
    %2512 = vmatpush1.msra.mxu0 0.0
    %2513 = vmatprep.subr.mxu0 0.0
    %2514 = vmatpush1.msra.mxu0 0.0
    %2515 = vmatprep.subr.mxu0 0.0
    %2516 = vmatpush1.msra.mxu0 0.0
    %2517 = vmatprep.subr.mxu0 0.0
    %2518 = vmatpush1.msra.mxu0 0.0
    %2519 = vmatprep.subr.mxu0 0.0
    %2520 = vmatpush1.msra.mxu0 0.0
    %2521 = vmatprep.subr.mxu0 0.0
    %2522 = vmatpush1.msra.mxu0 0.0
    %2523 = vmatprep.subr.mxu0 0.0
    %2524 = vmatpush1.msra.mxu0 0.0
    %2525 = vmatprep.mubr.f32.mxu0 0.0
    %2526 = vmatmul.mubr.f32.gmra.mrb[0].mxu0 %v1288
    %v2527 = vpop.f32.mrb[0].mxu0
    %v2528 = vadd.f32 %v1280, %v2527
    %v2529 = vpop.f32.mrb[0].mxu0
    %2530 = vmatprep.mubr.f32.mxu0 0.0
    %2531 = vmatmul.mubr.f32.gmra.mrb[0].mxu0 %v1291
    %v2532 = vpop.f32.mrb[0].mxu0
    %v2533 = vadd.f32 %v1285, %v2532
    %v2534 = vpop.f32.mrb[0].mxu0
    %2535 = vdwg.mxu0
    %vm2536 = vcmask 64512
    %2537 = vst.msk [vmem:[%s2] sm:$0xff] %vm2536, %v2528
    %vm2538 = vcmask 60416
    %2539 = vst.msk [vmem:[%s2 + $0x8] sm:$0xf] %vm2538, %v2533
    // Predicated region
    $region14: #{tpu_custom_call.1} parent=1 // pred_check
      _
    $region15: #{tpu_custom_call.1} parent=1 // pred_check_branch
      %2541 = sbr.rel (0) target = $region17
    $region16: #{tpu_custom_call.1} parent=1 // pred_region
      _
    $region17: #{tpu_custom_call.1} parent=1 // pred_fallthru
      _
    // Predicated region
    $region18: #{tpu_custom_call.1} parent=1 // pred_check
      _
    $region19: #{tpu_custom_call.1} parent=1 // pred_check_branch
      %2543 = sbr.rel (0) target = $region21
    $region20: #{tpu_custom_call.1} parent=1 // pred_region
      _
    $region21: #{tpu_custom_call.1} parent=1 // pred_fallthru
      _
    %2544 = vsyncpa [#allocation3], 1

</llo_original>
